<compile_context>
chip_gen: v7x
topology: tpu7x:2x2x1
jax: 0.10.0
libtpu: 0.0.40
codegen_flags: <defaults>
</compile_context>

<pallas_src>
import functools
import numpy as np
import jax
import jax.numpy as jnp
from jax import lax
from jax.experimental import pallas as pl
from jax.experimental.pallas import tpu as pltpu

NUM_CLASSES = 21  # reference feeds target=20 into a 20-way CE (out of range in torch); we use
BG_CLASS = 20     # 21 logits with index 20 = background so it is well defined.
PRIOR_ROWS = 11   # x1 y1 x2 y2 cx cy 1/w 1/h area log_w log_h


def _to_corner(cc):
    cx, cy, w, h = cc[..., 0], cc[..., 1], cc[..., 2], cc[..., 3]
    return jnp.stack([cx - w / 2, cy - h / 2, cx + w / 2, cy + h / 2], axis=-1)


def _to_cxcywh(co):
    x1, y1, x2, y2 = co[..., 0], co[..., 1], co[..., 2], co[..., 3]
    return jnp.stack([(x1 + x2) / 2, (y1 + y2) / 2, x2 - x1, y2 - y1], axis=-1)


def _ssd_loss_kernel(cls_ref, reg_ref, gtb_ref, geo_ref, clsoh_ref, prior_ref, tri_ref,
                     loss_ref, *, iou_thr, pos_cap, neg_cap, neg_ratio):
    logits = cls_ref[...]                      # (Bb, C, P) classes on sublanes, priors on lanes
    preg = reg_ref[...]                        # (Bb, 4, P)
    gtb = gtb_ref[...]                         # (Bb, G, 5)  x1 y1 x2 y2 area
    geo = geo_ref[...]                         # (Bb, 4, G)  cx cy log_w log_h
    cls_oh = clsoh_ref[...]                    # (Bb, G, C)  one-hot class labels
    pr = prior_ref[...]                        # (PRIOR_ROWS, P)
    Bb, C, P = logits.shape
    G = gtb.shape[1]

    # prior rows: (1, P), broadcast against (Bb, G, 1) / (Bb, 1, P)
    px1, py1, px2, py2 = pr[0:1, :], pr[1:2, :], pr[2:3, :], pr[3:4, :]
    p_cx, p_cy = pr[4:5, :], pr[5:6, :]
    inv_pw, inv_ph = pr[6:7, :], pr[7:8, :]
    area_p = pr[8:9, :]
    log_pw, log_ph = pr[9:10, :], pr[10:11, :]

    gx1, gy1, gx2, gy2 = gtb[:, :, 0:1], gtb[:, :, 1:2], gtb[:, :, 2:3], gtb[:, :, 3:4]
    area_g = gtb[:, :, 4:5]

    # ---------------- IoU matrix (Bb, G, P): priors on the lane axis ----------------
    iw = jnp.maximum(jnp.minimum(px2, gx2) - jnp.maximum(px1, gx1), 0.0)
    ih = jnp.maximum(jnp.minimum(py2, gy2) - jnp.maximum(py1, gy1), 0.0)
    inter = iw * ih
    iou = inter / (area_p + area_g - inter)    # exact division: threshold-sensitive

    g_iota = lax.broadcasted_iota(jnp.int32, (Bb, G, P), 1)
    p_iota = lax.broadcasted_iota(jnp.int32, (Bb, G, P), 2)

    # best gt per prior (iou.max over G); first-occurrence argmax via min-of-matching iota.
    # NOTE: relies on bit-exact equality of the recomputed max (same reduction order).
    ba_fits = jnp.max(iou, axis=1, keepdims=True)                                     # (Bb,1,P)
    ba_indx = jnp.min(jnp.where(iou == ba_fits, g_iota, G), axis=1, keepdims=True)    # (Bb,1,P)
    # best prior per gt (iou.max over P)
    bg_fits = jnp.max(iou, axis=2, keepdims=True)                                     # (Bb,G,1)
    bg_indx = jnp.min(jnp.where(iou == bg_fits, p_iota, P), axis=2, keepdims=True)    # (Bb,G,1)

    # index_fill_(fits, best_gt_indx, 2) and best_anchor_indx[best_gt_indx[j]] = j (last j wins)
    match = p_iota == bg_indx                                                         # (Bb,G,P)
    is_best = jnp.max(match.astype(jnp.int32), axis=1, keepdims=True) > 0             # (Bb,1,P)
    j_over = jnp.max(jnp.where(match, g_iota, -1), axis=1, keepdims=True)             # (Bb,1,P)
    fits = jnp.where(is_best, 2.0, ba_fits)
    indx = jnp.where(is_best, j_over, ba_indx)

    pos_f = (fits > iou_thr).astype(jnp.float32)                                      # (Bb,1,P)
    neg_f = (fits < iou_thr).astype(jnp.float32)

    # Inclusive prefix counts along P (reproduces the "[:K]" selection order) via ONE fused
    # bf16 MXU matmul against the resident upper-triangular constant. Values are exactly 0/1
    # and the accumulator is f32, so counts are exact integers.
    pn = jnp.concatenate([pos_f.reshape(Bb, P), neg_f.reshape(Bb, P)],
                         axis=0).astype(jnp.bfloat16)                                 # (2Bb,P)
    counts = jnp.dot(pn, tri_ref[...], preferred_element_type=jnp.float32)            # (2Bb,P)
    counts_pos = counts[:Bb].reshape(Bb, 1, P)
    counts_neg = counts[Bb:].reshape(Bb, 1, P)

    num_pos = counts_pos[:, :, P - 1:P]          # total positives = last inclusive count
    num_neg = counts_neg[:, :, P - 1:P]
    pos_k = jnp.minimum(num_pos, pos_cap)
    neg_k = jnp.where(num_pos <= pos_cap, jnp.floor(num_pos * neg_ratio), neg_cap)

    sel_pos = pos_f * (counts_pos <= pos_k).astype(jnp.float32)                       # (Bb,1,P)
    sel_neg = neg_f * (counts_neg <= neg_k).astype(jnp.float32)
    n_pos = pos_k                                                                     # (Bb,1,1)
    n_neg = jnp.minimum(num_neg, neg_k)

    # ---------------- cross entropy (class axis = sublanes) ----------------
    m = jnp.max(logits, axis=1, keepdims=True)                                        # (Bb,1,P)
    lse = m + jnp.log(jnp.sum(jnp.exp(logits - m), axis=1, keepdims=True))            # (Bb,1,P)

    onehot_g = (g_iota == indx).astype(jnp.float32)      # (Bb,G,P), exactly one 1 per (b,p)

    # target-class logit per prior via the MXU: per-GT picked logit, then G-select
    gt_logit = jnp.einsum('bgc,bcp->bgp', cls_oh, logits,
                          preferred_element_type=jnp.float32)                         # (Bb,G,P)
    picked_pos = jnp.sum(onehot_g * gt_logit, axis=1, keepdims=True)                  # (Bb,1,P)
    picked_bg = logits[:, BG_CLASS:BG_CLASS + 1, :]                                   # static slice
    ce_pos = lse - picked_pos
    ce_neg = lse - picked_bg

    # ---------------- regression targets (Encoder): matched-GT geometry via one MXU matmul
    sel_geo = jnp.einsum('bkg,bgp->bkp', geo, onehot_g,
                         preferred_element_type=jnp.float32)                          # (Bb,4,P)
    t_x = (sel_geo[:, 0:1, :] - p_cx) * inv_pw
    t_y = (sel_geo[:, 1:2, :] - p_cy) * inv_ph
    t_w = sel_geo[:, 2:3, :] - log_pw
    t_h = sel_geo[:, 3:4, :] - log_ph
    l1_row = (jnp.abs(preg[:, 0:1, :] - t_x) + jnp.abs(preg[:, 1:2, :] - t_y)
              + jnp.abs(preg[:, 2:3, :] - t_w) + jnp.abs(preg[:, 3:4, :] - t_h))      # (Bb,1,P)

    # guards: a batch element with zero positives / negatives contributes 0 instead of NaN.
    # exact reciprocals: operands are only (Bb,1,1), so cost is negligible and accuracy is free.
    inv_np = 1.0 / jnp.maximum(n_pos, 1.0)
    inv_nn = 1.0 / jnp.maximum(n_neg, 1.0)
    pos_cls_loss = jnp.sum(ce_pos * sel_pos, axis=2, keepdims=True) * inv_np
    pos_reg_loss = jnp.sum(l1_row * sel_pos, axis=2, keepdims=True) * (inv_np * 0.25)
    neg_loss = jnp.sum(ce_neg * sel_neg, axis=2, keepdims=True) * inv_nn

    # (Bb,1,1) per-image losses; the single-lane store is negligible (O(B) data total).
    loss_ref[...] = pos_cls_loss + pos_reg_loss + neg_loss


def _num_tensorcores():
    """Best-effort TensorCore count (1 on v5e/v6e; 2 per chip on v7x)."""
    try:
        info = pltpu.get_tpu_info()
        for name in ("num_cores", "core_count", "num_tensorcores", "tensor_cores"):
            v = getattr(info, name, None)
            if isinstance(v, int) and v > 0:
                return v
    except Exception:
        pass
    return 1


def _pick_block_batch(B, num_cores):
    # Largest divisor of B up to 32, but on multi-core parts only grow Bb while there are
    # still >= 2 chunks per TensorCore so the "parallel" grid axis can actually shard.
    cap = min(B, 32)
    for d in range(cap, 0, -1):
        if B % d != 0:
            continue
        nchunks = B // d
        if num_cores > 1 and d > 1 and nchunks < 2 * num_cores:
            continue
        return d
    return 1


def ssd_multibox_loss(pred_cls, pred_reg, gt_cls, gt_box, priors_cxcywh,
                      max_num=256, neg_ratio=3.0, iou_thr=0.5):
    pred_cls = pred_cls.astype(jnp.float32)
    pred_reg = pred_reg.astype(jnp.float32)
    gt_box = gt_box.astype(jnp.float32)
    B, P, C = pred_cls.shape
    G = gt_box.shape[1]

    # lane-major layouts: class / reg channels on sublanes, priors P on lanes
    cls_t = jnp.transpose(pred_cls, (0, 2, 1))                 # (B, C, P)
    reg_t = jnp.transpose(pred_reg, (0, 2, 1))                 # (B, 4, P)

    prior_co = _to_corner(priors_cxcywh.astype(jnp.float32))   # forward: to_corner_form(self.box())
    prior_cc = _to_cxcywh(prior_co)                            # Encoder re-converts to cxcywh
    px1, py1, px2, py2 = prior_co[:, 0], prior_co[:, 1], prior_co[:, 2], prior_co[:, 3]
    pcx, pcy, pw, ph = prior_cc[:, 0], prior_cc[:, 1], prior_cc[:, 2], prior_cc[:, 3]
    prior_slab = jnp.stack([px1, py1, px2, py2, pcx, pcy,
                            1.0 / pw, 1.0 / ph,
                            (px2 - px1) * (py2 - py1),
                            jnp.log(pw), jnp.log(ph)], axis=0)  # (PRIOR_ROWS, P)

    gcc = _to_cxcywh(gt_box)                                    # (B, G, 4) cx cy w h
    area_g = (gt_box[..., 2] - gt_box[..., 0]) * (gt_box[..., 3] - gt_box[..., 1])
    gt_box_slab = jnp.concatenate([gt_box, area_g[..., None]], axis=-1)     # (B, G, 5)
    eps = jnp.float32(1e-12)                                    # clamp degenerate boxes before log
    gt_geo = jnp.stack([gcc[..., 0], gcc[..., 1],
                        jnp.log(jnp.maximum(gcc[..., 2], eps)),
                        jnp.log(jnp.maximum(gcc[..., 3], eps))], axis=1)    # (B, 4, G)
    cls_oh = jax.nn.one_hot(gt_cls, NUM_CLASSES, dtype=jnp.float32)         # (B, G, C)

    # bf16 inclusive prefix-count operator (values 0/1 -> exact, single MXU pass)
    tri = jnp.triu(jnp.ones((P, P), jnp.float32)).astype(jnp.bfloat16)

    pos_cap = int(max_num * (1.0 / (neg_ratio + 1.0)))
    neg_cap = max_num - pos_cap

    Bb = _pick_block_batch(B, _num_tensorcores())
    nchunks = B // Bb

    kernel = functools.partial(_ssd_loss_kernel, iou_thr=float(iou_thr),
                               pos_cap=float(pos_cap), neg_cap=float(neg_cap),
                               neg_ratio=float(neg_ratio))

    per_batch = pl.pallas_call(
        kernel,
        out_shape=jax.ShapeDtypeStruct((B, 1, 1), jnp.float32),
        grid_spec=pltpu.PrefetchScalarGridSpec(
            num_scalar_prefetch=0,
            grid=(nchunks,),
            in_specs=[
                pl.BlockSpec((Bb, C, P), lambda c: (c, 0, 0)),
                pl.BlockSpec((Bb, 4, P), lambda c: (c, 0, 0)),
                pl.BlockSpec((Bb, G, 5), lambda c: (c, 0, 0)),
                pl.BlockSpec((Bb, 4, G), lambda c: (c, 0, 0)),
                pl.BlockSpec((Bb, G, C), lambda c: (c, 0, 0)),
                pl.BlockSpec((PRIOR_ROWS, P), lambda c: (0, 0)),   # resident constant
                pl.BlockSpec((P, P), lambda c: (0, 0)),            # tri (bf16), DMA'd once
            ],
            out_specs=pl.BlockSpec((Bb, 1, 1), lambda c: (c, 0, 0)),
        ),
        compiler_params=pltpu.CompilerParams(dimension_semantics=("parallel",)),
    )(cls_t, reg_t, gt_box_slab, gt_geo, cls_oh, prior_slab, tri)

    return jnp.mean(per_batch[:, 0, 0]).reshape(1)   # matches "Loss / len(gt_cls)" shape (1,)


def make_priors(fm=8, scales=(0.2, 0.35)):
    # Deterministic synthetic PriorBox(): fm x fm grid, |scales| square priors per cell (cx,cy,w,h).
    c = (np.arange(fm) + 0.5) / fm
    cy, cx = np.meshgrid(c, c, indexing="ij")
    priors = []
    for s in scales:
        priors.append(np.stack([cx.ravel(), cy.ravel(),
                                np.full(fm * fm, s), np.full(fm * fm, s)], axis=1))
    return jnp.asarray(np.concatenate(priors, axis=0), dtype=jnp.float32)   # (128, 4)


def reference_loss(pred_cls, pred_reg, gt_cls, gt_box, priors_cxcywh,
                   max_num=256, neg_ratio=3.0, iou_thr=0.5):
    pred_cls = np.asarray(pred_cls, np.float32)
    pred_reg = np.asarray(pred_reg, np.float32)
    gt_cls = np.asarray(gt_cls)
    gt_box = np.asarray(gt_box, np.float32)
    pri = np.asarray(priors_cxcywh, np.float32)

    def corner(cc):
        return np.stack([cc[:, 0] - cc[:, 2] / 2, cc[:, 1] - cc[:, 3] / 2,
                         cc[:, 0] + cc[:, 2] / 2, cc[:, 1] + cc[:, 3] / 2], axis=1)

    def cxcywh(co):
        return np.stack([(co[:, 0] + co[:, 2]) / 2, (co[:, 1] + co[:, 3]) / 2,
                         co[:, 2] - co[:, 0], co[:, 3] - co[:, 1]], axis=1)

    def iou_np(p, g):
        ix1 = np.maximum(p[:, None, 0], g[None, :, 0])
        iy1 = np.maximum(p[:, None, 1], g[None, :, 1])
        ix2 = np.minimum(p[:, None, 2], g[None, :, 2])
        iy2 = np.minimum(p[:, None, 3], g[None, :, 3])
        inter = np.maximum(ix2 - ix1, 0) * np.maximum(iy2 - iy1, 0)
        ap = (p[:, 2] - p[:, 0]) * (p[:, 3] - p[:, 1])
        ag = (g[:, 2] - g[:, 0]) * (g[:, 3] - g[:, 1])
        return inter / (ap[:, None] + ag[None, :] - inter)

    def ce(logits, tgt):
        m = logits.max(1, keepdims=True)
        lse = m[:, 0] + np.log(np.exp(logits - m).sum(1))
        return float((lse - logits[np.arange(len(tgt)), tgt]).mean())

    prior_co = corner(pri)
    prior_cc = cxcywh(prior_co)
    B = pred_cls.shape[0]
    G = gt_box.shape[1]
    total = 0.0
    for b in range(B):
        iou = iou_np(prior_co, gt_box[b])
        bg_indx = iou.argmax(0)
        ba_fits = iou.max(1)
        ba_indx = iou.argmax(1)
        ba_fits[bg_indx] = 2.0
        for j in range(G):
            ba_indx[bg_indx[j]] = j
        pos_idx = np.nonzero(ba_fits > iou_thr)[0]
        neg_idx = np.nonzero(ba_fits < iou_thr)[0]
        pos_cap = int(max_num * (1.0 / (neg_ratio + 1.0)))
        neg_num = max_num - pos_cap
        if pos_idx.size <= pos_cap:
            sel_pos = pos_idx
            neg_num = int(pos_idx.size * neg_ratio)
        else:
            sel_pos = pos_idx[:pos_cap]
        sel_neg = neg_idx[:neg_num]
        gi = ba_indx[sel_pos]
        gcc = cxcywh(gt_box[b])
        p = prior_cc[sel_pos]
        g = gcc[gi]
        t = np.stack([(g[:, 0] - p[:, 0]) / p[:, 2], (g[:, 1] - p[:, 1]) / p[:, 3],
                      np.log(g[:, 2] / p[:, 2]), np.log(g[:, 3] / p[:, 3])], axis=1)
        pos_cls = ce(pred_cls[b][sel_pos], gt_cls[b][gi])
        pos_reg = float(np.abs(pred_reg[b][sel_pos] - t).mean())
        neg_loss = ce(pred_cls[b][sel_neg], np.full(sel_neg.size, BG_CLASS, dtype=np.int64))
        total += pos_cls + pos_reg + neg_loss
    return total / B


if __name__ == "__main__":
    B, G = 2, 4
    priors = make_priors(fm=8, scales=(0.2, 0.35))          # (128, 4) cxcywh
    P = priors.shape[0]

    key = jax.random.PRNGKey(0)
    k1, k2, k3, k4, k5 = jax.random.split(key, 5)
    pred_cls = jax.random.normal(k1, (B, P, NUM_CLASSES), jnp.float32)
    pred_reg = 0.1 * jax.random.normal(k2, (B, P, 4), jnp.float32)
    cxy = jax.random.uniform(k3, (B, G, 2), minval=0.2, maxval=0.8)
    wh = jax.random.uniform(k4, (B, G, 2), minval=0.15, maxval=0.35)
    gt_box = _to_corner(jnp.concatenate([cxy, wh], axis=-1))  # (B, G, 4) corner form
    gt_cls = jax.random.randint(k5, (B, G), 0, 20)            # labels in [0, 20)

    loss = ssd_multibox_loss(pred_cls, pred_reg, gt_cls, gt_box, priors)
    loss = jax.block_until_ready(loss)

    ref = reference_loss(pred_cls, pred_reg, gt_cls, gt_box, priors)
    # tolerance covers the multi-pass f32 MXU one-hot picks (~1e-5 rel) and reduction-order
    # differences; 10x tighter than before now that 1/n_pos, 1/n_neg use exact reciprocals.
    np.testing.assert_allclose(np.asarray(loss)[0], ref, rtol=5e-4, atol=5e-4)
    print("KERNEL_OK")
</pallas_src>

<mosaic_0001>
module attributes {stable_mosaic.version = 11 : i64} {
  func.func @_ssd_loss_kernel(%arg0: i32, %arg1: memref<2x21x128xf32, #tpu.memory_space<vmem>>, %arg2: memref<2x4x128xf32, #tpu.memory_space<vmem>>, %arg3: memref<2x4x5xf32, #tpu.memory_space<vmem>>, %arg4: memref<2x4x4xf32, #tpu.memory_space<vmem>>, %arg5: memref<2x4x21xf32, #tpu.memory_space<vmem>>, %arg6: memref<11x128xf32, #tpu.memory_space<vmem>>, %arg7: memref<128x128xbf16, #tpu.memory_space<vmem>>, %arg8: memref<2x1x1xf32, #tpu.memory_space<vmem>>) attributes {dimension_semantics = [#tpu.dimension_semantics<parallel>], iteration_bounds = array<i64: 1>, scalar_prefetch = 0 : i64, scratch_operands = 0 : i64, tpu.core_type = #tpu.core_type<tc>, window_params = [{transform_indices = @transform_0, window_bounds = array<i64: 2, 21, 128>}, {transform_indices = @transform_1, window_bounds = array<i64: 2, 4, 128>}, {transform_indices = @transform_2, window_bounds = array<i64: 2, 4, 5>}, {transform_indices = @transform_3, window_bounds = array<i64: 2, 4, 4>}, {transform_indices = @transform_4, window_bounds = array<i64: 2, 4, 21>}, {pipeline_mode = #tpu.pipeline_mode<synchronous>, transform_indices = @transform_5, window_bounds = array<i64: 11, 128>}, {pipeline_mode = #tpu.pipeline_mode<synchronous>, transform_indices = @transform_6, window_bounds = array<i64: 128, 128>}, {transform_indices = @transform_7, window_bounds = array<i64: 2, 1, 1>}]} {
    %c0 = arith.constant 0 : index
    %c0_0 = arith.constant 0 : index
    %c0_1 = arith.constant 0 : index
    %0 = vector.load %arg1[%c0, %c0_0, %c0_1] : memref<2x21x128xf32, #tpu.memory_space<vmem>>, vector<2x21x128xf32>
    %c0_2 = arith.constant 0 : index
    %c0_3 = arith.constant 0 : index
    %c0_4 = arith.constant 0 : index
    %1 = vector.load %arg2[%c0_2, %c0_3, %c0_4] : memref<2x4x128xf32, #tpu.memory_space<vmem>>, vector<2x4x128xf32>
    %c0_5 = arith.constant 0 : index
    %c0_6 = arith.constant 0 : index
    %c0_7 = arith.constant 0 : index
    %2 = vector.load %arg3[%c0_5, %c0_6, %c0_7] : memref<2x4x5xf32, #tpu.memory_space<vmem>>, vector<2x4x5xf32>
    %c0_8 = arith.constant 0 : index
    %c0_9 = arith.constant 0 : index
    %c0_10 = arith.constant 0 : index
    %3 = vector.load %arg4[%c0_8, %c0_9, %c0_10] : memref<2x4x4xf32, #tpu.memory_space<vmem>>, vector<2x4x4xf32>
    %c0_11 = arith.constant 0 : index
    %c0_12 = arith.constant 0 : index
    %c0_13 = arith.constant 0 : index
    %4 = vector.load %arg5[%c0_11, %c0_12, %c0_13] : memref<2x4x21xf32, #tpu.memory_space<vmem>>, vector<2x4x21xf32>
    %c0_14 = arith.constant 0 : index
    %c0_15 = arith.constant 0 : index
    %5 = vector.load %arg6[%c0_14, %c0_15] : memref<11x128xf32, #tpu.memory_space<vmem>>, vector<11x128xf32>
    %6 = vector.extract_strided_slice %5 {offsets = [0, 0], sizes = [1, 128], strides = [1, 1]} : vector<11x128xf32> to vector<1x128xf32>
    %7 = vector.extract_strided_slice %5 {offsets = [1, 0], sizes = [1, 128], strides = [1, 1]} : vector<11x128xf32> to vector<1x128xf32>
    %8 = vector.extract_strided_slice %5 {offsets = [2, 0], sizes = [1, 128], strides = [1, 1]} : vector<11x128xf32> to vector<1x128xf32>
    %9 = vector.extract_strided_slice %5 {offsets = [3, 0], sizes = [1, 128], strides = [1, 1]} : vector<11x128xf32> to vector<1x128xf32>
    %10 = vector.extract_strided_slice %5 {offsets = [4, 0], sizes = [1, 128], strides = [1, 1]} : vector<11x128xf32> to vector<1x128xf32>
    %11 = vector.extract_strided_slice %5 {offsets = [5, 0], sizes = [1, 128], strides = [1, 1]} : vector<11x128xf32> to vector<1x128xf32>
    %12 = vector.extract_strided_slice %5 {offsets = [6, 0], sizes = [1, 128], strides = [1, 1]} : vector<11x128xf32> to vector<1x128xf32>
    %13 = vector.extract_strided_slice %5 {offsets = [7, 0], sizes = [1, 128], strides = [1, 1]} : vector<11x128xf32> to vector<1x128xf32>
    %14 = vector.extract_strided_slice %5 {offsets = [8, 0], sizes = [1, 128], strides = [1, 1]} : vector<11x128xf32> to vector<1x128xf32>
    %15 = vector.extract_strided_slice %5 {offsets = [9, 0], sizes = [1, 128], strides = [1, 1]} : vector<11x128xf32> to vector<1x128xf32>
    %16 = vector.extract_strided_slice %5 {offsets = [10, 0], sizes = [1, 128], strides = [1, 1]} : vector<11x128xf32> to vector<1x128xf32>
    %17 = vector.extract_strided_slice %2 {offsets = [0, 0, 0], sizes = [2, 4, 1], strides = [1, 1, 1]} : vector<2x4x5xf32> to vector<2x4x1xf32>
    %18 = vector.extract_strided_slice %2 {offsets = [0, 0, 1], sizes = [2, 4, 1], strides = [1, 1, 1]} : vector<2x4x5xf32> to vector<2x4x1xf32>
    %19 = vector.extract_strided_slice %2 {offsets = [0, 0, 2], sizes = [2, 4, 1], strides = [1, 1, 1]} : vector<2x4x5xf32> to vector<2x4x1xf32>
    %20 = vector.extract_strided_slice %2 {offsets = [0, 0, 3], sizes = [2, 4, 1], strides = [1, 1, 1]} : vector<2x4x5xf32> to vector<2x4x1xf32>
    %21 = vector.extract_strided_slice %2 {offsets = [0, 0, 4], sizes = [2, 4, 1], strides = [1, 1, 1]} : vector<2x4x5xf32> to vector<2x4x1xf32>
    %22 = vector.shape_cast %8 : vector<1x128xf32> to vector<1x1x128xf32>
    %23 = vector.broadcast %22 : vector<1x1x128xf32> to vector<2x4x128xf32>
    %24 = vector.broadcast %19 : vector<2x4x1xf32> to vector<2x4x128xf32>
    %25 = arith.minimumf %23, %24 : vector<2x4x128xf32>
    %26 = vector.shape_cast %6 : vector<1x128xf32> to vector<1x1x128xf32>
    %27 = vector.broadcast %26 : vector<1x1x128xf32> to vector<2x4x128xf32>
    %28 = vector.broadcast %17 : vector<2x4x1xf32> to vector<2x4x128xf32>
    %29 = arith.maximumf %27, %28 : vector<2x4x128xf32>
    %30 = arith.subf %25, %29 : vector<2x4x128xf32>
    %cst = arith.constant 0.000000e+00 : f32
    %31 = vector.broadcast %cst : f32 to vector<2x4x128xf32>
    %32 = arith.maximumf %30, %31 : vector<2x4x128xf32>
    %33 = vector.shape_cast %9 : vector<1x128xf32> to vector<1x1x128xf32>
    %34 = vector.broadcast %33 : vector<1x1x128xf32> to vector<2x4x128xf32>
    %35 = vector.broadcast %20 : vector<2x4x1xf32> to vector<2x4x128xf32>
    %36 = arith.minimumf %34, %35 : vector<2x4x128xf32>
    %37 = vector.shape_cast %7 : vector<1x128xf32> to vector<1x1x128xf32>
    %38 = vector.broadcast %37 : vector<1x1x128xf32> to vector<2x4x128xf32>
    %39 = vector.broadcast %18 : vector<2x4x1xf32> to vector<2x4x128xf32>
    %40 = arith.maximumf %38, %39 : vector<2x4x128xf32>
    %41 = arith.subf %36, %40 : vector<2x4x128xf32>
    %cst_16 = arith.constant 0.000000e+00 : f32
    %42 = vector.broadcast %cst_16 : f32 to vector<2x4x128xf32>
    %43 = arith.maximumf %41, %42 : vector<2x4x128xf32>
    %44 = arith.mulf %32, %43 : vector<2x4x128xf32>
    %45 = vector.shape_cast %14 : vector<1x128xf32> to vector<1x1x128xf32>
    %46 = vector.broadcast %45 : vector<1x1x128xf32> to vector<2x4x128xf32>
    %47 = vector.broadcast %21 : vector<2x4x1xf32> to vector<2x4x128xf32>
    %48 = arith.addf %46, %47 : vector<2x4x128xf32>
    %49 = arith.subf %48, %44 : vector<2x4x128xf32>
    %50 = arith.divf %44, %49 : vector<2x4x128xf32>
    %51 = tpu.iota {dimensions = array<i32: 1>} : vector<2x4x128xi32>
    %52 = tpu.iota {dimensions = array<i32: 2>} : vector<2x4x128xi32>
    %cst_17 = arith.constant dense<0xFF800000> : vector<2x128xf32>
    %53 = vector.multi_reduction <maximumf>, %50, %cst_17 [1] : vector<2x4x128xf32> to vector<2x128xf32>
    %54 = vector.shape_cast %53 : vector<2x128xf32> to vector<2x1x128xf32>
    %55 = vector.broadcast %54 : vector<2x1x128xf32> to vector<2x4x128xf32>
    %56 = arith.cmpf oeq, %50, %55 : vector<2x4x128xf32>
    %c4_i32 = arith.constant 4 : i32
    %57 = vector.broadcast %c4_i32 : i32 to vector<2x4x128xi32>
    %58 = arith.select %56, %51, %57 : vector<2x4x128xi1>, vector<2x4x128xi32>
    %cst_18 = arith.constant dense<2147483647> : vector<2x128xi32>
    %59 = vector.multi_reduction <minsi>, %58, %cst_18 [1] : vector<2x4x128xi32> to vector<2x128xi32>
    %60 = vector.shape_cast %59 : vector<2x128xi32> to vector<2x1x128xi32>
    %cst_19 = arith.constant dense<0xFF800000> : vector<2x4xf32>
    %61 = vector.multi_reduction <maximumf>, %50, %cst_19 [2] : vector<2x4x128xf32> to vector<2x4xf32>
    %62 = vector.shape_cast %61 : vector<2x4xf32> to vector<2x4x1xf32>
    %63 = vector.broadcast %62 : vector<2x4x1xf32> to vector<2x4x128xf32>
    %64 = arith.cmpf oeq, %50, %63 : vector<2x4x128xf32>
    %c128_i32 = arith.constant 128 : i32
    %65 = vector.broadcast %c128_i32 : i32 to vector<2x4x128xi32>
    %66 = arith.select %64, %52, %65 : vector<2x4x128xi1>, vector<2x4x128xi32>
    %cst_20 = arith.constant dense<2147483647> : vector<2x4xi32>
    %67 = vector.multi_reduction <minsi>, %66, %cst_20 [2] : vector<2x4x128xi32> to vector<2x4xi32>
    %68 = vector.shape_cast %67 : vector<2x4xi32> to vector<2x4x1xi32>
    %69 = vector.broadcast %68 : vector<2x4x1xi32> to vector<2x4x128xi32>
    %70 = arith.cmpi eq, %52, %69 : vector<2x4x128xi32>
    %71 = arith.extui %70 : vector<2x4x128xi1> to vector<2x4x128xi32>
    %cst_21 = arith.constant dense<-2147483648> : vector<2x128xi32>
    %72 = vector.multi_reduction <maxsi>, %71, %cst_21 [1] : vector<2x4x128xi32> to vector<2x128xi32>
    %73 = vector.shape_cast %72 : vector<2x128xi32> to vector<2x1x128xi32>
    %c0_i32 = arith.constant 0 : i32
    %74 = vector.broadcast %c0_i32 : i32 to vector<2x1x128xi32>
    %75 = arith.cmpi sgt, %73, %74 : vector<2x1x128xi32>
    %c-1_i32 = arith.constant -1 : i32
    %76 = vector.broadcast %c-1_i32 : i32 to vector<2x4x128xi32>
    %77 = arith.select %70, %51, %76 : vector<2x4x128xi1>, vector<2x4x128xi32>
    %cst_22 = arith.constant dense<-2147483648> : vector<2x128xi32>
    %78 = vector.multi_reduction <maxsi>, %77, %cst_22 [1] : vector<2x4x128xi32> to vector<2x128xi32>
    %79 = vector.shape_cast %78 : vector<2x128xi32> to vector<2x1x128xi32>
    %cst_23 = arith.constant 2.000000e+00 : f32
    %80 = vector.broadcast %cst_23 : f32 to vector<2x1x128xf32>
    %81 = arith.select %75, %80, %54 : vector<2x1x128xi1>, vector<2x1x128xf32>
    %82 = arith.select %75, %79, %60 : vector<2x1x128xi1>, vector<2x1x128xi32>
    %cst_24 = arith.constant 5.000000e-01 : f32
    %83 = vector.broadcast %cst_24 : f32 to vector<2x1x128xf32>
    %84 = arith.cmpf ogt, %81, %83 : vector<2x1x128xf32>
    %85 = arith.extui %84 : vector<2x1x128xi1> to vector<2x1x128xi32>
    %86 = arith.sitofp %85 : vector<2x1x128xi32> to vector<2x1x128xf32>
    %cst_25 = arith.constant 5.000000e-01 : f32
    %87 = vector.broadcast %cst_25 : f32 to vector<2x1x128xf32>
    %88 = arith.cmpf olt, %81, %87 : vector<2x1x128xf32>
    %89 = arith.extui %88 : vector<2x1x128xi1> to vector<2x1x128xi32>
    %90 = arith.sitofp %89 : vector<2x1x128xi32> to vector<2x1x128xf32>
    %91 = vector.shape_cast %86 : vector<2x1x128xf32> to vector<2x128xf32>
    %92 = vector.shape_cast %90 : vector<2x1x128xf32> to vector<2x128xf32>
    %93 = tpu.concatenate %91, %92 in 0 : vector<2x128xf32>, vector<2x128xf32> -> vector<4x128xf32>
    %94 = arith.truncf %93 : vector<4x128xf32> to vector<4x128xbf16>
    %c0_26 = arith.constant 0 : index
    %c0_27 = arith.constant 0 : index
    %95 = vector.load %arg7[%c0_26, %c0_27] : memref<128x128xbf16, #tpu.memory_space<vmem>>, vector<128x128xbf16>
    %cst_28 = arith.constant dense<0.000000e+00> : vector<4x128xf32>
    %96 = tpu.matmul %94, %95, %cst_28 {dimension_numbers = #tpu.dot_dimension_numbers<[1], [0], [0], [1], [0, 0, 1, 1], [], []>} : vector<4x128xbf16>, vector<128x128xbf16>, vector<4x128xf32> -> vector<4x128xf32>
    %97 = vector.extract_strided_slice %96 {offsets = [0, 0], sizes = [2, 128], strides = [1, 1]} : vector<4x128xf32> to vector<2x128xf32>
    %98 = vector.shape_cast %97 : vector<2x128xf32> to vector<2x1x128xf32>
    %99 = vector.extract_strided_slice %96 {offsets = [2, 0], sizes = [2, 128], strides = [1, 1]} : vector<4x128xf32> to vector<2x128xf32>
    %100 = vector.shape_cast %99 : vector<2x128xf32> to vector<2x1x128xf32>
    %101 = vector.extract_strided_slice %98 {offsets = [0, 0, 127], sizes = [2, 1, 1], strides = [1, 1, 1]} : vector<2x1x128xf32> to vector<2x1x1xf32>
    %102 = vector.extract_strided_slice %100 {offsets = [0, 0, 127], sizes = [2, 1, 1], strides = [1, 1, 1]} : vector<2x1x128xf32> to vector<2x1x1xf32>
    %cst_29 = arith.constant 6.400000e+01 : f32
    %103 = vector.broadcast %cst_29 : f32 to vector<2x1x1xf32>
    %104 = arith.minimumf %101, %103 : vector<2x1x1xf32>
    %cst_30 = arith.constant 6.400000e+01 : f32
    %105 = vector.broadcast %cst_30 : f32 to vector<2x1x1xf32>
    %106 = arith.cmpf ole, %101, %105 : vector<2x1x1xf32>
    %cst_31 = arith.constant 3.000000e+00 : f32
    %107 = vector.broadcast %cst_31 : f32 to vector<2x1x1xf32>
    %108 = arith.mulf %101, %107 : vector<2x1x1xf32>
    %109 = math.floor %108 : vector<2x1x1xf32>
    %cst_32 = arith.constant 1.920000e+02 : f32
    %110 = vector.broadcast %cst_32 : f32 to vector<2x1x1xf32>
    %111 = arith.select %106, %109, %110 : vector<2x1x1xi1>, vector<2x1x1xf32>
    %112 = vector.broadcast %104 : vector<2x1x1xf32> to vector<2x1x128xf32>
    %113 = arith.cmpf ole, %98, %112 : vector<2x1x128xf32>
    %114 = arith.extui %113 : vector<2x1x128xi1> to vector<2x1x128xi32>
    %115 = arith.sitofp %114 : vector<2x1x128xi32> to vector<2x1x128xf32>
    %116 = arith.mulf %86, %115 : vector<2x1x128xf32>
    %117 = vector.broadcast %111 : vector<2x1x1xf32> to vector<2x1x128xf32>
    %118 = arith.cmpf ole, %100, %117 : vector<2x1x128xf32>
    %119 = arith.extui %118 : vector<2x1x128xi1> to vector<2x1x128xi32>
    %120 = arith.sitofp %119 : vector<2x1x128xi32> to vector<2x1x128xf32>
    %121 = arith.mulf %90, %120 : vector<2x1x128xf32>
    %122 = arith.minimumf %102, %111 : vector<2x1x1xf32>
    %cst_33 = arith.constant dense<0xFF800000> : vector<2x128xf32>
    %123 = vector.multi_reduction <maximumf>, %0, %cst_33 [1] : vector<2x21x128xf32> to vector<2x128xf32>
    %124 = vector.shape_cast %123 : vector<2x128xf32> to vector<2x1x128xf32>
    %125 = vector.broadcast %124 : vector<2x1x128xf32> to vector<2x21x128xf32>
    %126 = arith.subf %0, %125 : vector<2x21x128xf32>
    %127 = math.exp %126 : vector<2x21x128xf32>
    %cst_34 = arith.constant dense<0.000000e+00> : vector<2x128xf32>
    %128 = vector.multi_reduction <add>, %127, %cst_34 [1] : vector<2x21x128xf32> to vector<2x128xf32>
    %129 = vector.shape_cast %128 : vector<2x128xf32> to vector<2x1x128xf32>
    %130 = math.log %129 : vector<2x1x128xf32>
    %131 = arith.addf %124, %130 : vector<2x1x128xf32>
    %132 = vector.broadcast %82 : vector<2x1x128xi32> to vector<2x4x128xi32>
    %133 = arith.cmpi eq, %51, %132 : vector<2x4x128xi32>
    %134 = arith.extui %133 : vector<2x4x128xi1> to vector<2x4x128xi32>
    %135 = arith.sitofp %134 : vector<2x4x128xi32> to vector<2x4x128xf32>
    "tpu.trace_start"() <{level = 10 : i32, message = "bgc,bcp->bgp"}> : () -> ()
    %cst_35 = arith.constant dense<0.000000e+00> : vector<2x4x128xf32>
    %136 = tpu.matmul %4, %0, %cst_35 {dimension_numbers = #tpu.dot_dimension_numbers<[2], [1], [1], [2], [0, 0, 0, 1, 1, 2], [0], [0]>} : vector<2x4x21xf32>, vector<2x21x128xf32>, vector<2x4x128xf32> -> vector<2x4x128xf32>
    "tpu.trace_stop"() : () -> ()
    %137 = arith.mulf %135, %136 : vector<2x4x128xf32>
    %cst_36 = arith.constant dense<0.000000e+00> : vector<2x128xf32>
    %138 = vector.multi_reduction <add>, %137, %cst_36 [1] : vector<2x4x128xf32> to vector<2x128xf32>
    %139 = vector.shape_cast %138 : vector<2x128xf32> to vector<2x1x128xf32>
    %140 = vector.extract_strided_slice %0 {offsets = [0, 20, 0], sizes = [2, 1, 128], strides = [1, 1, 1]} : vector<2x21x128xf32> to vector<2x1x128xf32>
    %141 = arith.subf %131, %139 : vector<2x1x128xf32>
    %142 = arith.subf %131, %140 : vector<2x1x128xf32>
    "tpu.trace_start"() <{level = 10 : i32, message = "bkg,bgp->bkp"}> : () -> ()
    %cst_37 = arith.constant dense<0.000000e+00> : vector<2x4x128xf32>
    %143 = tpu.matmul %3, %135, %cst_37 {dimension_numbers = #tpu.dot_dimension_numbers<[2], [1], [1], [2], [0, 0, 0, 1, 1, 2], [0], [0]>} : vector<2x4x4xf32>, vector<2x4x128xf32>, vector<2x4x128xf32> -> vector<2x4x128xf32>
    "tpu.trace_stop"() : () -> ()
    %144 = vector.extract_strided_slice %143 {offsets = [0, 0, 0], sizes = [2, 1, 128], strides = [1, 1, 1]} : vector<2x4x128xf32> to vector<2x1x128xf32>
    %145 = vector.shape_cast %10 : vector<1x128xf32> to vector<1x1x128xf32>
    %146 = vector.broadcast %145 : vector<1x1x128xf32> to vector<2x1x128xf32>
    %147 = arith.subf %144, %146 : vector<2x1x128xf32>
    %148 = vector.shape_cast %12 : vector<1x128xf32> to vector<1x1x128xf32>
    %149 = vector.broadcast %148 : vector<1x1x128xf32> to vector<2x1x128xf32>
    %150 = arith.mulf %147, %149 : vector<2x1x128xf32>
    %151 = vector.extract_strided_slice %143 {offsets = [0, 1, 0], sizes = [2, 1, 128], strides = [1, 1, 1]} : vector<2x4x128xf32> to vector<2x1x128xf32>
    %152 = vector.shape_cast %11 : vector<1x128xf32> to vector<1x1x128xf32>
    %153 = vector.broadcast %152 : vector<1x1x128xf32> to vector<2x1x128xf32>
    %154 = arith.subf %151, %153 : vector<2x1x128xf32>
    %155 = vector.shape_cast %13 : vector<1x128xf32> to vector<1x1x128xf32>
    %156 = vector.broadcast %155 : vector<1x1x128xf32> to vector<2x1x128xf32>
    %157 = arith.mulf %154, %156 : vector<2x1x128xf32>
    %158 = vector.extract_strided_slice %143 {offsets = [0, 2, 0], sizes = [2, 1, 128], strides = [1, 1, 1]} : vector<2x4x128xf32> to vector<2x1x128xf32>
    %159 = vector.shape_cast %15 : vector<1x128xf32> to vector<1x1x128xf32>
    %160 = vector.broadcast %159 : vector<1x1x128xf32> to vector<2x1x128xf32>
    %161 = arith.subf %158, %160 : vector<2x1x128xf32>
    %162 = vector.extract_strided_slice %143 {offsets = [0, 3, 0], sizes = [2, 1, 128], strides = [1, 1, 1]} : vector<2x4x128xf32> to vector<2x1x128xf32>
    %163 = vector.shape_cast %16 : vector<1x128xf32> to vector<1x1x128xf32>
    %164 = vector.broadcast %163 : vector<1x1x128xf32> to vector<2x1x128xf32>
    %165 = arith.subf %162, %164 : vector<2x1x128xf32>
    %166 = vector.extract_strided_slice %1 {offsets = [0, 0, 0], sizes = [2, 1, 128], strides = [1, 1, 1]} : vector<2x4x128xf32> to vector<2x1x128xf32>
    %167 = arith.subf %166, %150 : vector<2x1x128xf32>
    %168 = math.absf %167 : vector<2x1x128xf32>
    %169 = vector.extract_strided_slice %1 {offsets = [0, 1, 0], sizes = [2, 1, 128], strides = [1, 1, 1]} : vector<2x4x128xf32> to vector<2x1x128xf32>
    %170 = arith.subf %169, %157 : vector<2x1x128xf32>
    %171 = math.absf %170 : vector<2x1x128xf32>
    %172 = arith.addf %168, %171 : vector<2x1x128xf32>
    %173 = vector.extract_strided_slice %1 {offsets = [0, 2, 0], sizes = [2, 1, 128], strides = [1, 1, 1]} : vector<2x4x128xf32> to vector<2x1x128xf32>
    %174 = arith.subf %173, %161 : vector<2x1x128xf32>
    %175 = math.absf %174 : vector<2x1x128xf32>
    %176 = arith.addf %172, %175 : vector<2x1x128xf32>
    %177 = vector.extract_strided_slice %1 {offsets = [0, 3, 0], sizes = [2, 1, 128], strides = [1, 1, 1]} : vector<2x4x128xf32> to vector<2x1x128xf32>
    %178 = arith.subf %177, %165 : vector<2x1x128xf32>
    %179 = math.absf %178 : vector<2x1x128xf32>
    %180 = arith.addf %176, %179 : vector<2x1x128xf32>
    %cst_38 = arith.constant 1.000000e+00 : f32
    %181 = vector.broadcast %cst_38 : f32 to vector<2x1x1xf32>
    %182 = arith.maximumf %104, %181 : vector<2x1x1xf32>
    %cst_39 = arith.constant 1.000000e+00 : f32
    %183 = vector.broadcast %cst_39 : f32 to vector<2x1x1xf32>
    %184 = arith.divf %183, %182 : vector<2x1x1xf32>
    %cst_40 = arith.constant 1.000000e+00 : f32
    %185 = vector.broadcast %cst_40 : f32 to vector<2x1x1xf32>
    %186 = arith.maximumf %122, %185 : vector<2x1x1xf32>
    %cst_41 = arith.constant 1.000000e+00 : f32
    %187 = vector.broadcast %cst_41 : f32 to vector<2x1x1xf32>
    %188 = arith.divf %187, %186 : vector<2x1x1xf32>
    %189 = arith.mulf %141, %116 : vector<2x1x128xf32>
    %cst_42 = arith.constant dense<0.000000e+00> : vector<2x1xf32>
    %190 = vector.multi_reduction <add>, %189, %cst_42 [2] : vector<2x1x128xf32> to vector<2x1xf32>
    %191 = vector.shape_cast %190 : vector<2x1xf32> to vector<2x1x1xf32>
    %192 = arith.mulf %191, %184 : vector<2x1x1xf32>
    %193 = arith.mulf %180, %116 : vector<2x1x128xf32>
    %cst_43 = arith.constant dense<0.000000e+00> : vector<2x1xf32>
    %194 = vector.multi_reduction <add>, %193, %cst_43 [2] : vector<2x1x128xf32> to vector<2x1xf32>
    %195 = vector.shape_cast %194 : vector<2x1xf32> to vector<2x1x1xf32>
    %cst_44 = arith.constant 2.500000e-01 : f32
    %196 = vector.broadcast %cst_44 : f32 to vector<2x1x1xf32>
    %197 = arith.mulf %184, %196 : vector<2x1x1xf32>
    %198 = arith.mulf %195, %197 : vector<2x1x1xf32>
    %199 = arith.mulf %142, %121 : vector<2x1x128xf32>
    %cst_45 = arith.constant dense<0.000000e+00> : vector<2x1xf32>
    %200 = vector.multi_reduction <add>, %199, %cst_45 [2] : vector<2x1x128xf32> to vector<2x1xf32>
    %201 = vector.shape_cast %200 : vector<2x1xf32> to vector<2x1x1xf32>
    %202 = arith.mulf %201, %188 : vector<2x1x1xf32>
    %203 = arith.addf %192, %198 : vector<2x1x1xf32>
    %204 = arith.addf %203, %202 : vector<2x1x1xf32>
    %c0_46 = arith.constant 0 : index
    %c0_47 = arith.constant 0 : index
    %c0_48 = arith.constant 0 : index
    %205 = vector.load %arg8[%c0_46, %c0_47, %c0_48] : memref<2x1x1xf32, #tpu.memory_space<vmem>>, vector<2x1x1xf32>
    tpu.vector_store %arg8[%c0_46, %c0_47, %c0_48], %204 {strides = array<i32>} : memref<2x1x1xf32, #tpu.memory_space<vmem>>, vector<2x1x1xf32>,
    return
  }
  func.func @transform_0(%arg0: i32) -> (i32, i32, i32) {
    %c0_i32 = arith.constant 0 : i32
    %c0_i32_0 = arith.constant 0 : i32
    %c0_i32_1 = arith.constant 0 : i32
    return %arg0, %c0_i32, %c0_i32_0 : i32, i32, i32
  }
  func.func @transform_1(%arg0: i32) -> (i32, i32, i32) {
    %c0_i32 = arith.constant 0 : i32
    %c0_i32_0 = arith.constant 0 : i32
    %c0_i32_1 = arith.constant 0 : i32
    return %arg0, %c0_i32, %c0_i32_0 : i32, i32, i32
  }
  func.func @transform_2(%arg0: i32) -> (i32, i32, i32) {
    %c0_i32 = arith.constant 0 : i32
    %c0_i32_0 = arith.constant 0 : i32
    %c0_i32_1 = arith.constant 0 : i32
    return %arg0, %c0_i32, %c0_i32_0 : i32, i32, i32
  }
  func.func @transform_3(%arg0: i32) -> (i32, i32, i32) {
    %c0_i32 = arith.constant 0 : i32
    %c0_i32_0 = arith.constant 0 : i32
    %c0_i32_1 = arith.constant 0 : i32
    return %arg0, %c0_i32, %c0_i32_0 : i32, i32, i32
  }
  func.func @transform_4(%arg0: i32) -> (i32, i32, i32) {
    %c0_i32 = arith.constant 0 : i32
    %c0_i32_0 = arith.constant 0 : i32
    %c0_i32_1 = arith.constant 0 : i32
    return %arg0, %c0_i32, %c0_i32_0 : i32, i32, i32
  }
  func.func @transform_5(%arg0: i32) -> (i32, i32) {
    %c0_i32 = arith.constant 0 : i32
    %c0_i32_0 = arith.constant 0 : i32
    %c0_i32_1 = arith.constant 0 : i32
    return %c0_i32, %c0_i32_0 : i32, i32
  }
  func.func @transform_6(%arg0: i32) -> (i32, i32) {
    %c0_i32 = arith.constant 0 : i32
    %c0_i32_0 = arith.constant 0 : i32
    %c0_i32_1 = arith.constant 0 : i32
    return %c0_i32, %c0_i32_0 : i32, i32
  }
  func.func @transform_7(%arg0: i32) -> (i32, i32, i32) {
    %c0_i32 = arith.constant 0 : i32
    %c0_i32_0 = arith.constant 0 : i32
    %c0_i32_1 = arith.constant 0 : i32
    return %arg0, %c0_i32, %c0_i32_0 : i32, i32, i32
  }
}

</mosaic_0001>

<llo_original>
// kernel: tpu_custom_call.1
$region0: #{tpu_custom_call.1}
  #allocation0 [shape = 'u32[]', space=smem, size = 0x4, offset = 0x4, fixed_abs, tag = 'smem constant byte address 0x4 - core index']
  #allocation1 [shape = 'u32[144,128]{1,0:T(1,128)}', space=vmem, size = 0x12000, scoped, tag = 'internal scratch']
  %s0 = inlined_call_operand.vmem [shape: f32[2,21,128], index: 0, kind: input, shape index: {}]
  %s1 = inlined_call_operand.vmem [shape: f32[2,4,128], index: 1, kind: input, shape index: {}]
  %s2 = inlined_call_operand.vmem [shape: f32[2,4,5], index: 2, kind: input, shape index: {}]
  %s3 = inlined_call_operand.vmem [shape: f32[2,4,4], index: 3, kind: input, shape index: {}]
  %s4 = inlined_call_operand.vmem [shape: f32[2,4,21], index: 4, kind: input, shape index: {}]
  %s5 = inlined_call_operand.vmem [shape: f32[11,128], index: 5, kind: input, shape index: {}]
  %s6 = inlined_call_operand.vmem [shape: bf16[128,128], index: 6, kind: input, shape index: {}]
  %s7 = inlined_call_operand.vmem [shape: f32[2,1,1], index: 7, kind: output, shape index: {}]
  %s8 = sld [smem:[#allocation0]]
  $region38: #{tpu_custom_call.1} parent=0
    _
  %s10 = ssub.s32 1, %s8
  %s11 = scalar_select 0, %s10, %s8
  // Predicated region
  $region2: #{tpu_custom_call.1} parent=0 // pred_check
    _
  $region3: #{tpu_custom_call.1} parent=0 // pred_check_branch
    %13 = sbr.rel (0) target = $region5
  $region4: #{tpu_custom_call.1} parent=0 // pred_region
    _
  $region5: #{tpu_custom_call.1} parent=0 // pred_fallthru
    _
  // Predicated region
  $region6: #{tpu_custom_call.1} parent=0 // pred_check
    _
  $region7: #{tpu_custom_call.1} parent=0 // pred_check_branch
    %15 = sbr.rel (0) target = $region9
  $region8: #{tpu_custom_call.1} parent=0 // pred_region
    _
  $region9: #{tpu_custom_call.1} parent=0 // pred_fallthru
    _
  // Predicated region
  $region10: #{tpu_custom_call.1} parent=0 // pred_check
    _
  $region11: #{tpu_custom_call.1} parent=0 // pred_check_branch
    %17 = sbr.rel (0) target = $region13
  $region12: #{tpu_custom_call.1} parent=0 // pred_region
    _
  $region13: #{tpu_custom_call.1} parent=0 // pred_fallthru
    _
  // Predicated region
  $region14: #{tpu_custom_call.1} parent=0 // pred_check
    _
  $region15: #{tpu_custom_call.1} parent=0 // pred_check_branch
    %19 = sbr.rel (0) target = $region17
  $region16: #{tpu_custom_call.1} parent=0 // pred_region
    _
  $region17: #{tpu_custom_call.1} parent=0 // pred_fallthru
    _
  // Predicated region
  $region18: #{tpu_custom_call.1} parent=0 // pred_check
    _
  $region19: #{tpu_custom_call.1} parent=0 // pred_check_branch
    %21 = sbr.rel (0) target = $region21
  $region20: #{tpu_custom_call.1} parent=0 // pred_region
    _
  $region21: #{tpu_custom_call.1} parent=0 // pred_fallthru
    _
  // Predicated region
  $region22: #{tpu_custom_call.1} parent=0 // pred_check
    _
  $region23: #{tpu_custom_call.1} parent=0 // pred_check_branch
    %23 = sbr.rel (0) target = $region25
  $region24: #{tpu_custom_call.1} parent=0 // pred_region
    _
  $region25: #{tpu_custom_call.1} parent=0 // pred_fallthru
    _
  // Predicated region
  $region26: #{tpu_custom_call.1} parent=0 // pred_check
    _
  $region27: #{tpu_custom_call.1} parent=0 // pred_check_branch
    %25 = sbr.rel (0) target = $region29
  $region28: #{tpu_custom_call.1} parent=0 // pred_region
    _
  $region29: #{tpu_custom_call.1} parent=0 // pred_fallthru
    _
  %v27 = vld [vmem:[%s0] sm:$0xff]
  %v28 = vld [vmem:[%s0 + $0x8] sm:$0xff]
  %v29 = vld [vmem:[%s0 + $0x10] sm:$0x1f]
  %v30 = vld [vmem:[%s0 + $0x18] sm:$0xff]
  %v31 = vld [vmem:[%s0 + $0x20] sm:$0xff]
  %v32 = vld [vmem:[%s0 + $0x28] sm:$0x1f]
  %v33 = vld [vmem:[%s1] sm:$0xf]
  %v34 = vld [vmem:[%s1 + $0x4] sm:$0xf]
  %v35 = vld [vmem:[%s2] sm:$0xf]
  %v36 = vld [vmem:[%s2 + $0x4] sm:$0xf]
  %v37 = vld [vmem:[%s3] sm:$0xf]
  %v38 = vld [vmem:[%s3 + $0x4] sm:$0xf]
  %v39 = vld [vmem:[%s4] sm:$0xf]
  %v40 = vld [vmem:[%s4 + $0x4] sm:$0xf]
  %v41 = vld [vmem:[%s5] sm:$0xff]
  %v42 = vld [vmem:[%s5 + $0x8] sm:$0x7]
  %v43 = vlaneseq
  %v44 = vshrl.u32 %v43, 7
  %v45 = vsub.s32 2, %v44
  %v46 = vrot.slane %v41, %v45
  %48 = vset.pattern.permute.xlu0 2
  %49 = vperm.xlu0 %48, %v35
  %v50 = vpop.permute.xlu0 %49
  %53 = vset.pattern.permute.xlu0 2
  %54 = vperm.xlu0 %53, %v36
  %v55 = vpop.permute.xlu0 %54
  %v57 = vmin.f32 %v46, %v50
  %v58 = vmin.f32 %v46, %v55
  %v59 = vlaneseq
  %v60 = vshrl.u32 %v59, 7
  %v61 = vsub.s32 0, %v60
  %v62 = vrot.slane %v41, %v61
  %63 = vset.pattern.permute.xlu0 0
  %64 = vperm.xlu0 %63, %v35
  %v65 = vpop.permute.xlu0 %64
  %67 = vset.pattern.permute.xlu0 0
  %68 = vperm.xlu0 %67, %v36
  %v69 = vpop.permute.xlu0 %68
  %v71 = vmax.f32 %v62, %v65
  %v72 = vmax.f32 %v62, %v69
  %v73 = vsub.f32 %v57, %v71
  %v74 = vsub.f32 %v58, %v72
  %v75 = vmax.f32 %v73, 0.0
  %v76 = vmax.f32 %v74, 0.0
  %v77 = vlaneseq
  %v78 = vshrl.u32 %v77, 7
  %v79 = vsub.s32 3, %v78
  %v80 = vrot.slane %v41, %v79
  %81 = vset.pattern.permute.xlu0 3
  %82 = vperm.xlu0 %81, %v35
  %v83 = vpop.permute.xlu0 %82
  %85 = vset.pattern.permute.xlu0 3
  %86 = vperm.xlu0 %85, %v36
  %v87 = vpop.permute.xlu0 %86
  %v89 = vmin.f32 %v80, %v83
  %v90 = vmin.f32 %v80, %v87
  %v91 = vlaneseq
  %v92 = vshrl.u32 %v91, 7
  %v93 = vsub.s32 1, %v92
  %v94 = vrot.slane %v41, %v93
  %95 = vset.pattern.permute.xlu0 1
  %96 = vperm.xlu0 %95, %v35
  %v97 = vpop.permute.xlu0 %96
  %99 = vset.pattern.permute.xlu0 1
  %100 = vperm.xlu0 %99, %v36
  %v101 = vpop.permute.xlu0 %100
  %v103 = vmax.f32 %v94, %v97
  %v104 = vmax.f32 %v94, %v101
  %v105 = vsub.f32 %v89, %v103
  %v106 = vsub.f32 %v90, %v104
  %v107 = vmax.f32 %v105, 0.0
  %v108 = vmax.f32 %v106, 0.0
  %v109 = vmul.f32 %v75, %v107
  %v110 = vmul.f32 %v76, %v108
  %v111 = vlaneseq
  %v112 = vshrl.u32 %v111, 7
  %v113 = vsub.s32 0, %v112
  %v114 = vrot.slane %v42, %v113
  %115 = vset.pattern.permute.xlu0 4
  %116 = vperm.xlu0 %115, %v35
  %v117 = vpop.permute.xlu0 %116
  %119 = vset.pattern.permute.xlu0 4
  %120 = vperm.xlu0 %119, %v36
  %v121 = vpop.permute.xlu0 %120
  %v123 = vadd.f32 %v114, %v117
  %v124 = vadd.f32 %v114, %v121
  %v125 = vsub.f32 %v123, %v109
  %v126 = vsub.f32 %v124, %v110
  %v127 = vrcp.pop %v125
  %v128 = vmul.f32 %v109, %v127
  %v129 = vrcp.pop %v126
  %v130 = vmul.f32 %v110, %v129
  %v131 = vlaneseq
  %v132 = vshrl.u32 %v131, 7
  %v133 = vlaneseq
  %v134 = vand.u32 %v133, 127
  %vm135 = vcmask 1043456
  %v136 = vsel %vm135, %v128, -inf
  %v137 = vrot.slane %v136, 4
  %v138 = vmax.f32 %v136, %v137
  %v139 = vrot.slane %v138, 2
  %v140 = vmax.f32 %v138, %v139
  %v141 = vrot.slane %v140, 1
  %v142 = vmax.f32 %v140, %v141
  %v143 = vsel %vm135, %v130, -inf
  %v144 = vrot.slane %v143, 4
  %v145 = vmax.f32 %v143, %v144
  %v146 = vrot.slane %v145, 2
  %v147 = vmax.f32 %v145, %v146
  %v148 = vrot.slane %v147, 1
  %v149 = vmax.f32 %v147, %v148
  %vm150 = vcmp.eq.f32.partialorder %v128, %v142
  %vm151 = vcmp.eq.f32.partialorder %v130, %v149
  %v152 = vsel %vm150, %v132, 4
  %v153 = vsel %vm151, %v132, 4
  %v154 = vsel %vm135, %v152, 2147483647
  %v155 = vrot.slane %v154, 4
  %vm156 = vcmp.lt.s32.totalorder %v154, %v155
  %v157 = vsel %vm156, %v154, %v155
  %v158 = vrot.slane %v157, 2
  %vm159 = vcmp.lt.s32.totalorder %v157, %v158
  %v160 = vsel %vm159, %v157, %v158
  %v161 = vrot.slane %v160, 1
  %vm162 = vcmp.lt.s32.totalorder %v160, %v161
  %v163 = vsel %vm162, %v160, %v161
  %v164 = vsel %vm135, %v153, 2147483647
  %v165 = vrot.slane %v164, 4
  %vm166 = vcmp.lt.s32.totalorder %v164, %v165
  %v167 = vsel %vm166, %v164, %v165
  %v168 = vrot.slane %v167, 2
  %vm169 = vcmp.lt.s32.totalorder %v167, %v168
  %v170 = vsel %vm169, %v167, %v168
  %v171 = vrot.slane %v170, 1
  %vm172 = vcmp.lt.s32.totalorder %v170, %v171
  %v173 = vsel %vm172, %v170, %v171
  %174 = vmax.xlane.f32.xlu0 %v136
  %v175 = vpop.xlane.xlu0 %174
  %176 = vmax.xlane.f32.xlu0 %v143
  %v177 = vpop.xlane.xlu0 %176
  %vm178 = vcmp.eq.f32.partialorder %v128, %v175
  %vm179 = vcmp.eq.f32.partialorder %v130, %v177
  %v180 = vsel %vm178, %v134, 128
  %v181 = vsel %vm179, %v134, 128
  %v182 = vsel %vm135, %v180, 2147483647
  %v183 = vand.u32 %v182, 65535
  %v184 = vshra.s32 %v182, 16
  %v185 = vcvt.s32.f32 %v183
  %v186 = vcvt.s32.f32 %v184
  %187 = vmin.xlane.f32.xlu0 %v186
  %v188 = vpop.xlane.xlu0 %187
  %vm189 = vcmp.eq.f32.partialorder %v186, %v188
  %v190 = vsel %vm189, %v185, inf
  %191 = vmin.xlane.f32.xlu0 %v190
  %v192 = vpop.xlane.xlu0 %191
  %v193 = vcvt.f32.s32 %v192
  %v194 = vcvt.f32.s32 %v188
  %v195 = vshll.u32 %v194, 16
  %v196 = vadd.s32 %v195, %v193
  %v197 = vsel %vm135, %v181, 2147483647
  %v198 = vand.u32 %v197, 65535
  %v199 = vshra.s32 %v197, 16
  %v200 = vcvt.s32.f32 %v198
  %v201 = vcvt.s32.f32 %v199
  %202 = vmin.xlane.f32.xlu0 %v201
  %v203 = vpop.xlane.xlu0 %202
  %vm204 = vcmp.eq.f32.partialorder %v201, %v203
  %v205 = vsel %vm204, %v200, inf
  %206 = vmin.xlane.f32.xlu0 %v205
  %v207 = vpop.xlane.xlu0 %206
  %v208 = vcvt.f32.s32 %v207
  %v209 = vcvt.f32.s32 %v203
  %v210 = vshll.u32 %v209, 16
  %v211 = vadd.s32 %v210, %v208
  %vm212 = vcmp.eq.s32.totalorder %v134, %v196
  %vm213 = vcmp.eq.s32.totalorder %v134, %v211
  %v214 = vsel %vm212, 1, 0
  %v215 = vsel %vm213, 1, 0
  %v216 = vsel %vm135, %v214, 2147483648
  %v217 = vrot.slane %v216, 4
  %vm218 = vcmp.gt.s32.totalorder %v216, %v217
  %v219 = vsel %vm218, %v216, %v217
  %v220 = vrot.slane %v219, 2
  %vm221 = vcmp.gt.s32.totalorder %v219, %v220
  %v222 = vsel %vm221, %v219, %v220
  %v223 = vrot.slane %v222, 1
  %vm224 = vcmp.gt.s32.totalorder %v222, %v223
  %v225 = vsel %vm224, %v222, %v223
  %v226 = vsel %vm135, %v215, 2147483648
  %v227 = vrot.slane %v226, 4
  %vm228 = vcmp.gt.s32.totalorder %v226, %v227
  %v229 = vsel %vm228, %v226, %v227
  %v230 = vrot.slane %v229, 2
  %vm231 = vcmp.gt.s32.totalorder %v229, %v230
  %v232 = vsel %vm231, %v229, %v230
  %v233 = vrot.slane %v232, 1
  %vm234 = vcmp.gt.s32.totalorder %v232, %v233
  %v235 = vsel %vm234, %v232, %v233
  %vm236 = vcmp.gt.s32.totalorder %v225, 0
  %vm237 = vcmp.gt.s32.totalorder %v235, 0
  %v238 = vsel %vm212, %v132, 4294967295
  %v239 = vsel %vm213, %v132, 4294967295
  %v240 = vsel %vm135, %v238, 2147483648
  %v241 = vrot.slane %v240, 4
  %vm242 = vcmp.gt.s32.totalorder %v240, %v241
  %v243 = vsel %vm242, %v240, %v241
  %v244 = vrot.slane %v243, 2
  %vm245 = vcmp.gt.s32.totalorder %v243, %v244
  %v246 = vsel %vm245, %v243, %v244
  %v247 = vrot.slane %v246, 1
  %vm248 = vcmp.gt.s32.totalorder %v246, %v247
  %v249 = vsel %vm248, %v246, %v247
  %v250 = vsel %vm135, %v239, 2147483648
  %v251 = vrot.slane %v250, 4
  %vm252 = vcmp.gt.s32.totalorder %v250, %v251
  %v253 = vsel %vm252, %v250, %v251
  %v254 = vrot.slane %v253, 2
  %vm255 = vcmp.gt.s32.totalorder %v253, %v254
  %v256 = vsel %vm255, %v253, %v254
  %v257 = vrot.slane %v256, 1
  %vm258 = vcmp.gt.s32.totalorder %v256, %v257
  %v259 = vsel %vm258, %v256, %v257
  %v260 = vsel %vm236, 2.0, %v142
  %v261 = vsel %vm237, 2.0, %v149
  %v262 = vsel %vm236, %v249, %v163
  %v263 = vsel %vm237, %v259, %v173
  %vm264 = vcmp.gt.f32.partialorder %v260, 0.5
  %vm265 = vcmp.gt.f32.partialorder %v261, 0.5
  %v266 = vsel %vm264, 1, 0
  %v267 = vsel %vm265, 1, 0
  %v268 = vcvt.s32.f32 %v266
  %v269 = vcvt.s32.f32 %v267
  %vm270 = vcmp.lt.f32.partialorder %v260, 0.5
  %vm271 = vcmp.lt.f32.partialorder %v261, 0.5
  %v272 = vsel %vm270, 1, 0
  %v273 = vsel %vm271, 1, 0
  %v274 = vcvt.s32.f32 %v272
  %v275 = vcvt.s32.f32 %v273
  %vm278 = vcmask 1041409
  %v279 = vsel %vm278, %v269, %v268
  %vm283 = vcmask 1043459
  %v284 = vsel %vm283, %v275, %v274
  %vm286 = vcmask 1041408
  %v287 = vsel %vm286, %v279, %v284
  %v288 = vpack.c.bf16 %v287, %v287
  %v289 = vld [vmem:[%s6] sm:$0xf]
  %v290 = vld [vmem:[%s6 + $0x4] sm:$0xf]
  %v291 = vld [vmem:[%s6 + $0x8] sm:$0xf]
  %v292 = vld [vmem:[%s6 + $0xc] sm:$0xf]
  %v293 = vld [vmem:[%s6 + $0x10] sm:$0xf]
  %v294 = vld [vmem:[%s6 + $0x14] sm:$0xf]
  %v295 = vld [vmem:[%s6 + $0x18] sm:$0xf]
  %v296 = vld [vmem:[%s6 + $0x1c] sm:$0xf]
  %v297 = vld [vmem:[%s6 + $0x20] sm:$0xf]
  %v298 = vld [vmem:[%s6 + $0x24] sm:$0xf]
  %v299 = vld [vmem:[%s6 + $0x28] sm:$0xf]
  %v300 = vld [vmem:[%s6 + $0x2c] sm:$0xf]
  %v301 = vld [vmem:[%s6 + $0x30] sm:$0xf]
  %v302 = vld [vmem:[%s6 + $0x34] sm:$0xf]
  %v303 = vld [vmem:[%s6 + $0x38] sm:$0xf]
  %v304 = vld [vmem:[%s6 + $0x3c] sm:$0xf]
  %v321 = vunpack.c.l.b16 %v289
  %v322 = vunpack.c.l.b16 %v290
  %v323 = vunpack.c.l.b16 %v291
  %v324 = vunpack.c.l.b16 %v292
  %v325 = vunpack.c.l.b16 %v293
  %v326 = vunpack.c.l.b16 %v294
  %v327 = vunpack.c.l.b16 %v295
  %v328 = vunpack.c.l.b16 %v296
  %v329 = vunpack.c.l.b16 %v297
  %v330 = vunpack.c.l.b16 %v298
  %v331 = vunpack.c.l.b16 %v299
  %v332 = vunpack.c.l.b16 %v300
  %v333 = vunpack.c.l.b16 %v301
  %v334 = vunpack.c.l.b16 %v302
  %v335 = vunpack.c.l.b16 %v303
  %v336 = vunpack.c.l.b16 %v304
  %v337 = vpack.c.b16 %v322, %v321
  %v338 = vpack.c.b16 %v324, %v323
  %v339 = vpack.c.b16 %v326, %v325
  %v340 = vpack.c.b16 %v328, %v327
  %v341 = vpack.c.b16 %v330, %v329
  %v342 = vpack.c.b16 %v332, %v331
  %v343 = vpack.c.b16 %v334, %v333
  %v344 = vpack.c.b16 %v336, %v335
  %353 = vmatprep.subr.bf16.mxu0 0
  %354 = vmatpush1.bf16.msra.mxu0 %v337
  %355 = vmatprep.subr.bf16.mxu0 0
  %356 = vmatpush1.bf16.msra.mxu0 %v338
  %357 = vmatprep.subr.bf16.mxu0 0
  %358 = vmatpush1.bf16.msra.mxu0 %v339
  %359 = vmatprep.subr.bf16.mxu0 0
  %360 = vmatpush1.bf16.msra.mxu0 %v340
  %361 = vmatprep.subr.bf16.mxu0 0
  %362 = vmatpush1.bf16.msra.mxu0 %v341
  %363 = vmatprep.subr.bf16.mxu0 0
  %364 = vmatpush1.bf16.msra.mxu0 %v342
  %365 = vmatprep.subr.bf16.mxu0 0
  %366 = vmatpush1.bf16.msra.mxu0 %v343
  %367 = vmatprep.subr.bf16.mxu0 0
  %368 = vmatpush1.bf16.msra.mxu0 %v344
  %369 = vmatprep.subr.bf16.mxu0 0
  %370 = vmatpush1.bf16.msra.mxu0 0
  %371 = vmatprep.subr.bf16.mxu0 0
  %372 = vmatpush1.bf16.msra.mxu0 0
  %373 = vmatprep.subr.bf16.mxu0 0
  %374 = vmatpush1.bf16.msra.mxu0 0
  %375 = vmatprep.subr.bf16.mxu0 0
  %376 = vmatpush1.bf16.msra.mxu0 0
  %377 = vmatprep.subr.bf16.mxu0 0
  %378 = vmatpush1.bf16.msra.mxu0 0
  %379 = vmatprep.subr.bf16.mxu0 0
  %380 = vmatpush1.bf16.msra.mxu0 0
  %381 = vmatprep.subr.bf16.mxu0 0
  %382 = vmatpush1.bf16.msra.mxu0 0
  %383 = vmatprep.subr.bf16.mxu0 0
  %384 = vmatpush1.bf16.msra.mxu0 0
  %385 = vmatprep.mubr.bf16.mxu0 0
  %386 = vmatmul.mubr.bf16.gmra.mrb[0].mxu0 %v288
  %v387 = vpop.f32.mrb[0].mxu0
  %v388 = vadd.f32 0.0, %v387
  %v389 = vpop.f32.mrb[0].mxu0
  %v390 = vpop.f32.mrb[0].mxu0
  %v391 = vpop.f32.mrb[0].mxu0
  %392 = vdwg.mxu0
  %v395 = vunpack.c.l.s4 1966171168
  %v396 = vunpack.c.0.s8 %v395
  %v397 = vlaneseq
  %v398 = vshrl.u32 %v397, 7
  %v399 = vsub.s32 %v396, %v398
  %v400 = vrot.slane %v388, %v399
  %v401 = vcombine.high %v400, %v400
  %v403 = vunpack.c.l.s4 1966171168
  %v404 = vunpack.c.0.s8 %v403
  %v405 = vlaneseq
  %v406 = vshrl.u32 %v405, 7
  %v407 = vsub.s32 %v404, %v406
  %v408 = vrot.slane %v400, %v407
  %v410 = vunpack.c.l.s4 1966171168
  %v411 = vunpack.c.0.s8 %v410
  %v412 = vlaneseq
  %v413 = vshrl.u32 %v412, 7
  %v414 = vsub.s32 %v411, %v413
  %v415 = vrot.slane %v401, %v414
  %v418 = vcombine.high %v408, %v408
  %v419 = vcombine.high %v415, %v415
  %v422 = vmin.f32 %v408, 64.0
  %v423 = vmin.f32 %v415, 64.0
  %vm424 = vcmp.le.f32.partialorder %v408, 64.0
  %vm425 = vcmp.le.f32.partialorder %v415, 64.0
  %v426 = vmul.f32 %v408, 3.0
  %v427 = vmul.f32 %v415, 3.0
  %v428 = vfloor.f32 %v426
  %v429 = vfloor.f32 %v427
  %v430 = vsel %vm424, %v428, 192.0
  %v431 = vsel %vm425, %v429, 192.0
  %433 = vset.pattern.permute.xlu0 127
  %434 = vperm.xlu0 %433, %v422
  %v435 = vpop.permute.xlu0 %434
  %v437 = vlaneseq
  %v438 = vshrl.u32 %v437, 7
  %v439 = vsub.s32 0, %v438
  %v440 = vrot.slane %v435, %v439
  %442 = vset.pattern.permute.xlu0 127
  %443 = vperm.xlu0 %442, %v423
  %v444 = vpop.permute.xlu0 %443
  %v446 = vlaneseq
  %v447 = vshrl.u32 %v446, 7
  %v448 = vsub.s32 0, %v447
  %v449 = vrot.slane %v444, %v448
  %vm450 = vcmp.le.f32.partialorder %v408, %v440
  %vm451 = vcmp.le.f32.partialorder %v415, %v449
  %v452 = vsel %vm450, 1, 0
  %v453 = vsel %vm451, 1, 0
  %v454 = vcvt.s32.f32 %v452
  %v455 = vcvt.s32.f32 %v453
  %v456 = vmul.f32 %v268, %v454
  %v457 = vmul.f32 %v269, %v455
  %459 = vset.pattern.permute.xlu0 127
  %460 = vperm.xlu0 %459, %v430
  %v461 = vpop.permute.xlu0 %460
  %v463 = vlaneseq
  %v464 = vshrl.u32 %v463, 7
  %v465 = vsub.s32 0, %v464
  %v466 = vrot.slane %v461, %v465
  %468 = vset.pattern.permute.xlu0 127
  %469 = vperm.xlu0 %468, %v431
  %v470 = vpop.permute.xlu0 %469
  %v472 = vlaneseq
  %v473 = vshrl.u32 %v472, 7
  %v474 = vsub.s32 0, %v473
  %v475 = vrot.slane %v470, %v474
  %vm476 = vcmp.le.f32.partialorder %v418, %v466
  %vm477 = vcmp.le.f32.partialorder %v419, %v475
  %v478 = vsel %vm476, 1, 0
  %v479 = vsel %vm477, 1, 0
  %v480 = vcvt.s32.f32 %v478
  %v481 = vcvt.s32.f32 %v479
  %v482 = vmul.f32 %v274, %v480
  %v483 = vmul.f32 %v275, %v481
  %v484 = vmin.f32 %v418, %v430
  %v485 = vmin.f32 %v419, %v431
  %vm486 = vcmask 1044480
  %v487 = vsel %vm486, %v29, -inf
  %v488 = vmax.f32 %v27, %v487
  %v489 = vmax.f32 %v488, %v28
  %v490 = vrot.slane %v489, 4
  %v491 = vmax.f32 %v489, %v490
  %v492 = vrot.slane %v491, 2
  %v493 = vmax.f32 %v491, %v492
  %v494 = vrot.slane %v493, 1
  %v495 = vmax.f32 %v493, %v494
  %v496 = vsel %vm486, %v32, -inf
  %v497 = vmax.f32 %v30, %v496
  %v498 = vmax.f32 %v497, %v31
  %v499 = vrot.slane %v498, 4
  %v500 = vmax.f32 %v498, %v499
  %v501 = vrot.slane %v500, 2
  %v502 = vmax.f32 %v500, %v501
  %v503 = vrot.slane %v502, 1
  %v504 = vmax.f32 %v502, %v503
  %v505 = vsub.f32 %v27, %v495
  %v506 = vsub.f32 %v28, %v495
  %v507 = vsub.f32 %v29, %v495
  %v508 = vsub.f32 %v30, %v504
  %v509 = vsub.f32 %v31, %v504
  %v510 = vsub.f32 %v32, %v504
  %v511 = vmul.f32 %v505, 1.442695
  %v512 = vpow.pop %v511
  %v513 = vmul.f32 %v506, 1.442695
  %v514 = vpow.pop %v513
  %v515 = vmul.f32 %v507, 1.442695
  %v516 = vpow.pop %v515
  %v517 = vmul.f32 %v508, 1.442695
  %v518 = vpow.pop %v517
  %v519 = vmul.f32 %v509, 1.442695
  %v520 = vpow.pop %v519
  %v521 = vmul.f32 %v510, 1.442695
  %v522 = vpow.pop %v521
  %v523 = vadd.f32 %v512, %v514
  %v524 = vsel %vm486, %v516, 0.0
  %v525 = vadd.f32 %v523, %v524
  %v526 = vrot.slane %v525, 4
  %v527 = vadd.f32 %v525, %v526
  %v528 = vrot.slane %v527, 2
  %v529 = vadd.f32 %v527, %v528
  %v530 = vrot.slane %v529, 1
  %v531 = vadd.f32 %v529, %v530
  %v532 = vadd.f32 %v518, %v520
  %v533 = vsel %vm486, %v522, 0.0
  %v534 = vadd.f32 %v532, %v533
  %v535 = vrot.slane %v534, 4
  %v536 = vadd.f32 %v534, %v535
  %v537 = vrot.slane %v536, 2
  %v538 = vadd.f32 %v536, %v537
  %v539 = vrot.slane %v538, 1
  %v540 = vadd.f32 %v538, %v539
  %v541 = vlog2.pop %v531
  %v542 = vmul.f32 %v541, 0.6931472
  %v543 = vlog2.pop %v540
  %v544 = vmul.f32 %v543, 0.6931472
  %v545 = vadd.f32 %v495, %v542
  %v546 = vadd.f32 %v504, %v544
  %vm547 = vcmp.eq.s32.totalorder %v132, %v262
  %vm548 = vcmp.eq.s32.totalorder %v132, %v263
  %v549 = vsel %vm547, 1, 0
  %v550 = vsel %vm548, 1, 0
  %v551 = vcvt.s32.f32 %v549
  %v552 = vcvt.s32.f32 %v550
  %vm553 = vcmask 171008
  %v555 = vsel %vm553, %v39, 0
  %v558 = vsel %vm486, %v29, 0
  %560 = vmatprep.subr.mxu0 0.0
  %561 = vmatpush1.msra.mxu0 %v27
  %562 = vmatprep.subr.mxu0 0.0
  %563 = vmatpush1.msra.mxu0 %v28
  %564 = vmatprep.subr.mxu0 0.0
  %565 = vmatpush1.msra.mxu0 %v558
  %566 = vmatprep.subr.mxu0 0.0
  %567 = vmatpush1.msra.mxu0 0.0
  %568 = vmatprep.subr.mxu0 0.0
  %569 = vmatpush1.msra.mxu0 0.0
  %570 = vmatprep.subr.mxu0 0.0
  %571 = vmatpush1.msra.mxu0 0.0
  %572 = vmatprep.subr.mxu0 0.0
  %573 = vmatpush1.msra.mxu0 0.0
  %574 = vmatprep.subr.mxu0 0.0
  %575 = vmatpush1.msra.mxu0 0.0
  %576 = vmatprep.subr.mxu0 0.0
  %577 = vmatpush1.msra.mxu0 0.0
  %578 = vmatprep.subr.mxu0 0.0
  %579 = vmatpush1.msra.mxu0 0.0
  %580 = vmatprep.subr.mxu0 0.0
  %581 = vmatpush1.msra.mxu0 0.0
  %582 = vmatprep.subr.mxu0 0.0
  %583 = vmatpush1.msra.mxu0 0.0
  %584 = vmatprep.subr.mxu0 0.0
  %585 = vmatpush1.msra.mxu0 0.0
  %586 = vmatprep.subr.mxu0 0.0
  %587 = vmatpush1.msra.mxu0 0.0
  %588 = vmatprep.subr.mxu0 0.0
  %589 = vmatpush1.msra.mxu0 0.0
  %590 = vmatprep.subr.mxu0 0.0
  %591 = vmatpush1.msra.mxu0 0.0
  %592 = vmatprep.subr.mxu0 0.0
  %593 = vmatpush1.msra.mxu0 0.0
  %594 = vmatprep.subr.mxu0 0.0
  %595 = vmatpush1.msra.mxu0 0.0
  %596 = vmatprep.subr.mxu0 0.0
  %597 = vmatpush1.msra.mxu0 0.0
  %598 = vmatprep.subr.mxu0 0.0
  %599 = vmatpush1.msra.mxu0 0.0
  %600 = vmatprep.subr.mxu0 0.0
  %601 = vmatpush1.msra.mxu0 0.0
  %602 = vmatprep.subr.mxu0 0.0
  %603 = vmatpush1.msra.mxu0 0.0
  %604 = vmatprep.subr.mxu0 0.0
  %605 = vmatpush1.msra.mxu0 0.0
  %606 = vmatprep.subr.mxu0 0.0
  %607 = vmatpush1.msra.mxu0 0.0
  %608 = vmatprep.subr.mxu0 0.0
  %609 = vmatpush1.msra.mxu0 0.0
  %610 = vmatprep.subr.mxu0 0.0
  %611 = vmatpush1.msra.mxu0 0.0
  %612 = vmatprep.subr.mxu0 0.0
  %613 = vmatpush1.msra.mxu0 0.0
  %614 = vmatprep.subr.mxu0 0.0
  %615 = vmatpush1.msra.mxu0 0.0
  %616 = vmatprep.subr.mxu0 0.0
  %617 = vmatpush1.msra.mxu0 0.0
  %618 = vmatprep.subr.mxu0 0.0
  %619 = vmatpush1.msra.mxu0 0.0
  %620 = vmatprep.subr.mxu0 0.0
  %621 = vmatpush1.msra.mxu0 0.0
  %622 = vmatprep.subr.mxu0 0.0
  %623 = vmatpush1.msra.mxu0 0.0
  %624 = vmatprep.mubr.f32.mxu0 0.0
  %625 = vmatmul.mubr.f32.gmra.mrb[0].mxu0 %v555
  %v626 = vpop.f32.mrb[0].mxu0
  %v627 = vadd.f32 0.0, %v626
  %v628 = vpop.f32.mrb[0].mxu0
  %629 = vdwg.mxu0
  %v631 = vsel %vm553, %v40, 0
  %v634 = vsel %vm486, %v32, 0
  %636 = vmatprep.subr.mxu0 0.0
  %637 = vmatpush1.msra.mxu0 %v30
  %638 = vmatprep.subr.mxu0 0.0
  %639 = vmatpush1.msra.mxu0 %v31
  %640 = vmatprep.subr.mxu0 0.0
  %641 = vmatpush1.msra.mxu0 %v634
  %642 = vmatprep.subr.mxu0 0.0
  %643 = vmatpush1.msra.mxu0 0.0
  %644 = vmatprep.subr.mxu0 0.0
  %645 = vmatpush1.msra.mxu0 0.0
  %646 = vmatprep.subr.mxu0 0.0
  %647 = vmatpush1.msra.mxu0 0.0
  %648 = vmatprep.subr.mxu0 0.0
  %649 = vmatpush1.msra.mxu0 0.0
  %650 = vmatprep.subr.mxu0 0.0
  %651 = vmatpush1.msra.mxu0 0.0
  %652 = vmatprep.subr.mxu0 0.0
  %653 = vmatpush1.msra.mxu0 0.0
  %654 = vmatprep.subr.mxu0 0.0
  %655 = vmatpush1.msra.mxu0 0.0
  %656 = vmatprep.subr.mxu0 0.0
  %657 = vmatpush1.msra.mxu0 0.0
  %658 = vmatprep.subr.mxu0 0.0
  %659 = vmatpush1.msra.mxu0 0.0
  %660 = vmatprep.subr.mxu0 0.0
  %661 = vmatpush1.msra.mxu0 0.0
  %662 = vmatprep.subr.mxu0 0.0
  %663 = vmatpush1.msra.mxu0 0.0
  %664 = vmatprep.subr.mxu0 0.0
  %665 = vmatpush1.msra.mxu0 0.0
  %666 = vmatprep.subr.mxu0 0.0
  %667 = vmatpush1.msra.mxu0 0.0
  %668 = vmatprep.subr.mxu0 0.0
  %669 = vmatpush1.msra.mxu0 0.0
  %670 = vmatprep.subr.mxu0 0.0
  %671 = vmatpush1.msra.mxu0 0.0
  %672 = vmatprep.subr.mxu0 0.0
  %673 = vmatpush1.msra.mxu0 0.0
  %674 = vmatprep.subr.mxu0 0.0
  %675 = vmatpush1.msra.mxu0 0.0
  %676 = vmatprep.subr.mxu0 0.0
  %677 = vmatpush1.msra.mxu0 0.0
  %678 = vmatprep.subr.mxu0 0.0
  %679 = vmatpush1.msra.mxu0 0.0
  %680 = vmatprep.subr.mxu0 0.0
  %681 = vmatpush1.msra.mxu0 0.0
  %682 = vmatprep.subr.mxu0 0.0
  %683 = vmatpush1.msra.mxu0 0.0
  %684 = vmatprep.subr.mxu0 0.0
  %685 = vmatpush1.msra.mxu0 0.0
  %686 = vmatprep.subr.mxu0 0.0
  %687 = vmatpush1.msra.mxu0 0.0
  %688 = vmatprep.subr.mxu0 0.0
  %689 = vmatpush1.msra.mxu0 0.0
  %690 = vmatprep.subr.mxu0 0.0
  %691 = vmatpush1.msra.mxu0 0.0
  %692 = vmatprep.subr.mxu0 0.0
  %693 = vmatpush1.msra.mxu0 0.0
  %694 = vmatprep.subr.mxu0 0.0
  %695 = vmatpush1.msra.mxu0 0.0
  %696 = vmatprep.subr.mxu0 0.0
  %697 = vmatpush1.msra.mxu0 0.0
  %698 = vmatprep.subr.mxu0 0.0
  %699 = vmatpush1.msra.mxu0 0.0
  %700 = vmatprep.mubr.f32.mxu0 0.0
  %701 = vmatmul.mubr.f32.gmra.mrb[0].mxu0 %v631
  %v702 = vpop.f32.mrb[0].mxu0
  %v703 = vadd.f32 0.0, %v702
  %v704 = vpop.f32.mrb[0].mxu0
  %705 = vdwg.mxu0
  %v706 = vmul.f32 %v551, %v627
  %v707 = vmul.f32 %v552, %v703
  %v708 = vsel %vm135, %v706, 0.0
  %v709 = vrot.slane %v708, 4
  %v710 = vadd.f32 %v708, %v709
  %v711 = vrot.slane %v710, 2
  %v712 = vadd.f32 %v710, %v711
  %v713 = vrot.slane %v712, 1
  %v714 = vadd.f32 %v712, %v713
  %v715 = vsel %vm135, %v707, 0.0
  %v716 = vrot.slane %v715, 4
  %v717 = vadd.f32 %v715, %v716
  %v718 = vrot.slane %v717, 2
  %v719 = vadd.f32 %v717, %v718
  %v720 = vrot.slane %v719, 1
  %v721 = vadd.f32 %v719, %v720
  %v722 = vsub.f32 %v545, %v714
  %v723 = vsub.f32 %v546, %v721
  %v724 = vsub.f32 %v545, %v29
  %v725 = vsub.f32 %v546, %v32
  %vm726 = vcmask 31744
  %v728 = vsel %vm726, %v37, 0
  %v731 = vsel %vm135, %v551, 0
  %733 = vmatprep.subr.mxu0 0.0
  %734 = vmatpush1.msra.mxu0 %v731
  %735 = vmatprep.subr.mxu0 0.0
  %736 = vmatpush1.msra.mxu0 0.0
  %737 = vmatprep.subr.mxu0 0.0
  %738 = vmatpush1.msra.mxu0 0.0
  %739 = vmatprep.subr.mxu0 0.0
  %740 = vmatpush1.msra.mxu0 0.0
  %741 = vmatprep.subr.mxu0 0.0
  %742 = vmatpush1.msra.mxu0 0.0
  %743 = vmatprep.subr.mxu0 0.0
  %744 = vmatpush1.msra.mxu0 0.0
  %745 = vmatprep.subr.mxu0 0.0
  %746 = vmatpush1.msra.mxu0 0.0
  %747 = vmatprep.subr.mxu0 0.0
  %748 = vmatpush1.msra.mxu0 0.0
  %749 = vmatprep.subr.mxu0 0.0
  %750 = vmatpush1.msra.mxu0 0.0
  %751 = vmatprep.subr.mxu0 0.0
  %752 = vmatpush1.msra.mxu0 0.0
  %753 = vmatprep.subr.mxu0 0.0
  %754 = vmatpush1.msra.mxu0 0.0
  %755 = vmatprep.subr.mxu0 0.0
  %756 = vmatpush1.msra.mxu0 0.0
  %757 = vmatprep.subr.mxu0 0.0
  %758 = vmatpush1.msra.mxu0 0.0
  %759 = vmatprep.subr.mxu0 0.0
  %760 = vmatpush1.msra.mxu0 0.0
  %761 = vmatprep.subr.mxu0 0.0
  %762 = vmatpush1.msra.mxu0 0.0
  %763 = vmatprep.subr.mxu0 0.0
  %764 = vmatpush1.msra.mxu0 0.0
  %765 = vmatprep.subr.mxu0 0.0
  %766 = vmatpush1.msra.mxu0 0.0
  %767 = vmatprep.subr.mxu0 0.0
  %768 = vmatpush1.msra.mxu0 0.0
  %769 = vmatprep.subr.mxu0 0.0
  %770 = vmatpush1.msra.mxu0 0.0
  %771 = vmatprep.subr.mxu0 0.0
  %772 = vmatpush1.msra.mxu0 0.0
  %773 = vmatprep.subr.mxu0 0.0
  %774 = vmatpush1.msra.mxu0 0.0
  %775 = vmatprep.subr.mxu0 0.0
  %776 = vmatpush1.msra.mxu0 0.0
  %777 = vmatprep.subr.mxu0 0.0
  %778 = vmatpush1.msra.mxu0 0.0
  %779 = vmatprep.subr.mxu0 0.0
  %780 = vmatpush1.msra.mxu0 0.0
  %781 = vmatprep.subr.mxu0 0.0
  %782 = vmatpush1.msra.mxu0 0.0
  %783 = vmatprep.subr.mxu0 0.0
  %784 = vmatpush1.msra.mxu0 0.0
  %785 = vmatprep.subr.mxu0 0.0
  %786 = vmatpush1.msra.mxu0 0.0
  %787 = vmatprep.subr.mxu0 0.0
  %788 = vmatpush1.msra.mxu0 0.0
  %789 = vmatprep.subr.mxu0 0.0
  %790 = vmatpush1.msra.mxu0 0.0
  %791 = vmatprep.subr.mxu0 0.0
  %792 = vmatpush1.msra.mxu0 0.0
  %793 = vmatprep.subr.mxu0 0.0
  %794 = vmatpush1.msra.mxu0 0.0
  %795 = vmatprep.subr.mxu0 0.0
  %796 = vmatpush1.msra.mxu0 0.0
  %797 = vmatprep.mubr.f32.mxu0 0.0
  %798 = vmatmul.mubr.f32.gmra.mrb[0].mxu0 %v728
  %v799 = vpop.f32.mrb[0].mxu0
  %v800 = vadd.f32 0.0, %v799
  %v801 = vpop.f32.mrb[0].mxu0
  %802 = vdwg.mxu0
  %v804 = vsel %vm726, %v38, 0
  %v807 = vsel %vm135, %v552, 0
  %809 = vmatprep.subr.mxu0 0.0
  %810 = vmatpush1.msra.mxu0 %v807
  %811 = vmatprep.subr.mxu0 0.0
  %812 = vmatpush1.msra.mxu0 0.0
  %813 = vmatprep.subr.mxu0 0.0
  %814 = vmatpush1.msra.mxu0 0.0
  %815 = vmatprep.subr.mxu0 0.0
  %816 = vmatpush1.msra.mxu0 0.0
  %817 = vmatprep.subr.mxu0 0.0
  %818 = vmatpush1.msra.mxu0 0.0
  %819 = vmatprep.subr.mxu0 0.0
  %820 = vmatpush1.msra.mxu0 0.0
  %821 = vmatprep.subr.mxu0 0.0
  %822 = vmatpush1.msra.mxu0 0.0
  %823 = vmatprep.subr.mxu0 0.0
  %824 = vmatpush1.msra.mxu0 0.0
  %825 = vmatprep.subr.mxu0 0.0
  %826 = vmatpush1.msra.mxu0 0.0
  %827 = vmatprep.subr.mxu0 0.0
  %828 = vmatpush1.msra.mxu0 0.0
  %829 = vmatprep.subr.mxu0 0.0
  %830 = vmatpush1.msra.mxu0 0.0
  %831 = vmatprep.subr.mxu0 0.0
  %832 = vmatpush1.msra.mxu0 0.0
  %833 = vmatprep.subr.mxu0 0.0
  %834 = vmatpush1.msra.mxu0 0.0
  %835 = vmatprep.subr.mxu0 0.0
  %836 = vmatpush1.msra.mxu0 0.0
  %837 = vmatprep.subr.mxu0 0.0
  %838 = vmatpush1.msra.mxu0 0.0
  %839 = vmatprep.subr.mxu0 0.0
  %840 = vmatpush1.msra.mxu0 0.0
  %841 = vmatprep.subr.mxu0 0.0
  %842 = vmatpush1.msra.mxu0 0.0
  %843 = vmatprep.subr.mxu0 0.0
  %844 = vmatpush1.msra.mxu0 0.0
  %845 = vmatprep.subr.mxu0 0.0
  %846 = vmatpush1.msra.mxu0 0.0
  %847 = vmatprep.subr.mxu0 0.0
  %848 = vmatpush1.msra.mxu0 0.0
  %849 = vmatprep.subr.mxu0 0.0
  %850 = vmatpush1.msra.mxu0 0.0
  %851 = vmatprep.subr.mxu0 0.0
  %852 = vmatpush1.msra.mxu0 0.0
  %853 = vmatprep.subr.mxu0 0.0
  %854 = vmatpush1.msra.mxu0 0.0
  %855 = vmatprep.subr.mxu0 0.0
  %856 = vmatpush1.msra.mxu0 0.0
  %857 = vmatprep.subr.mxu0 0.0
  %858 = vmatpush1.msra.mxu0 0.0
  %859 = vmatprep.subr.mxu0 0.0
  %860 = vmatpush1.msra.mxu0 0.0
  %861 = vmatprep.subr.mxu0 0.0
  %862 = vmatpush1.msra.mxu0 0.0
  %863 = vmatprep.subr.mxu0 0.0
  %864 = vmatpush1.msra.mxu0 0.0
  %865 = vmatprep.subr.mxu0 0.0
  %866 = vmatpush1.msra.mxu0 0.0
  %867 = vmatprep.subr.mxu0 0.0
  %868 = vmatpush1.msra.mxu0 0.0
  %869 = vmatprep.subr.mxu0 0.0
  %870 = vmatpush1.msra.mxu0 0.0
  %871 = vmatprep.subr.mxu0 0.0
  %872 = vmatpush1.msra.mxu0 0.0
  %873 = vmatprep.mubr.f32.mxu0 0.0
  %874 = vmatmul.mubr.f32.gmra.mrb[0].mxu0 %v804
  %v875 = vpop.f32.mrb[0].mxu0
  %v876 = vadd.f32 0.0, %v875
  %v877 = vpop.f32.mrb[0].mxu0
  %878 = vdwg.mxu0
  %v880 = vrot.slane %v41, 4
  %v882 = vsub.f32 %v800, %v880
  %v883 = vsub.f32 %v876, %v880
  %v884 = vrot.slane %v41, 6
  %v886 = vmul.f32 %v882, %v884
  %v887 = vmul.f32 %v883, %v884
  %v889 = vrot.slane %v42, 7
  %v891 = vsub.f32 %v800, %v889
  %v892 = vsub.f32 %v876, %v889
  %v893 = vsub.f32 %v33, %v886
  %v894 = vsub.f32 %v34, %v887
  %v895 = vand.u32 2147483647, %v893
  %v896 = vand.u32 2147483647, %v894
  %v899 = vrot.slane %v895, 1
  %v900 = vrot.slane %v896, 1
  %v903 = vadd.f32 %v895, %v899
  %v904 = vadd.f32 %v896, %v900
  %v905 = vsub.f32 %v33, %v891
  %v906 = vsub.f32 %v34, %v892
  %v907 = vand.u32 2147483647, %v905
  %v908 = vand.u32 2147483647, %v906
  %v911 = vrot.slane %v907, 2
  %v912 = vrot.slane %v908, 2
  %v915 = vadd.f32 %v903, %v911
  %v916 = vadd.f32 %v904, %v912
  %v917 = vrot.slane %v907, 3
  %v918 = vrot.slane %v908, 3
  %v921 = vadd.f32 %v915, %v917
  %v922 = vadd.f32 %v916, %v918
  %v923 = vmax.f32 %v422, 1.0
  %v924 = vmax.f32 %v423, 1.0
  %v925 = vrcp.pop %v923
  %v926 = vmul.f32 1.0, %v925
  %v927 = vrcp.pop %v924
  %v928 = vmul.f32 1.0, %v927
  %v929 = vmax.f32 %v484, 1.0
  %v930 = vmax.f32 %v485, 1.0
  %v931 = vrcp.pop %v929
  %v932 = vmul.f32 1.0, %v931
  %v933 = vrcp.pop %v930
  %v934 = vmul.f32 1.0, %v933
  %v935 = vmul.f32 %v722, %v456
  %v936 = vmul.f32 %v723, %v457
  %vm937 = vcmask 1040384
  %v938 = vsel %vm937, %v935, 0.0
  %939 = vadd.xlane.f32.xlu0 %v938
  %v940 = vpop.xlane.xlu0 %939
  %v941 = vsel %vm937, %v936, 0.0
  %942 = vadd.xlane.f32.xlu0 %v941
  %v943 = vpop.xlane.xlu0 %942
  %v946 = vlaneseq
  %v947 = vshrl.u32 %v946, 7
  %v948 = vsub.s32 0, %v947
  %v949 = vrot.slane %v926, %v948
  %v950 = vlaneseq
  %v951 = vshrl.u32 %v950, 7
  %v952 = vsub.s32 0, %v951
  %v953 = vrot.slane %v928, %v952
  %954 = vrot.lane.b32.xlu0 %v949, 1
  %v955 = vpop.permute.xlu0 %954
  %956 = vrot.lane.b32.xlu0 %v953, 1
  %v957 = vpop.permute.xlu0 %956
  %v960 = vmul.f32 %v940, %v955
  %v961 = vmul.f32 %v943, %v957
  %v962 = vmul.f32 %v921, %v456
  %v963 = vmul.f32 %v922, %v457
  %v964 = vsel %vm937, %v962, 0.0
  %965 = vadd.xlane.f32.xlu0 %v964
  %v966 = vpop.xlane.xlu0 %965
  %v967 = vsel %vm937, %v963, 0.0
  %968 = vadd.xlane.f32.xlu0 %v967
  %v969 = vpop.xlane.xlu0 %968
  %v970 = vmul.f32 %v926, 0.25
  %v971 = vmul.f32 %v928, 0.25
  %v974 = vlaneseq
  %v975 = vshrl.u32 %v974, 7
  %v976 = vsub.s32 0, %v975
  %v977 = vrot.slane %v970, %v976
  %v978 = vlaneseq
  %v979 = vshrl.u32 %v978, 7
  %v980 = vsub.s32 0, %v979
  %v981 = vrot.slane %v971, %v980
  %982 = vrot.lane.b32.xlu0 %v977, 1
  %v983 = vpop.permute.xlu0 %982
  %984 = vrot.lane.b32.xlu0 %v981, 1
  %v985 = vpop.permute.xlu0 %984
  %v988 = vmul.f32 %v966, %v983
  %v989 = vmul.f32 %v969, %v985
  %v992 = vrot.slane %v482, 4
  %v993 = vrot.slane %v483, 4
  %v996 = vmul.f32 %v724, %v992
  %v997 = vmul.f32 %v725, %v993
  %vm998 = vcmask 1044484
  %v999 = vsel %vm998, %v996, 0.0
  %1000 = vadd.xlane.f32.xlu0 %v999
  %v1001 = vpop.xlane.xlu0 %1000
  %v1002 = vsel %vm998, %v997, 0.0
  %1003 = vadd.xlane.f32.xlu0 %v1002
  %v1004 = vpop.xlane.xlu0 %1003
  %v1007 = vlaneseq
  %v1008 = vshrl.u32 %v1007, 7
  %v1009 = vsub.s32 0, %v1008
  %v1010 = vrot.slane %v932, %v1009
  %v1011 = vlaneseq
  %v1012 = vshrl.u32 %v1011, 7
  %v1013 = vsub.s32 0, %v1012
  %v1014 = vrot.slane %v934, %v1013
  %1015 = vrot.lane.b32.xlu0 %v1010, 1
  %v1016 = vpop.permute.xlu0 %1015
  %1017 = vrot.lane.b32.xlu0 %v1014, 1
  %v1018 = vpop.permute.xlu0 %1017
  %v1021 = vmul.f32 %v1001, %v1016
  %v1022 = vmul.f32 %v1004, %v1018
  %v1023 = vadd.f32 %v960, %v988
  %v1024 = vadd.f32 %v961, %v989
  %v1027 = vrot.slane %v1021, 4
  %v1028 = vrot.slane %v1022, 4
  %v1031 = vadd.f32 %v1023, %v1027
  %v1032 = vadd.f32 %v1024, %v1028
  %vm1033 = vcmask 0
  %1034 = vst.msk [vmem:[%s7] sm:$0x1] %vm1033, %v1031
  %1035 = vst.msk [vmem:[%s7 + $0x1] sm:$0x1] %vm1033, %v1032
  // Predicated region
  $region30: #{tpu_custom_call.1} parent=0 // pred_check
    _
  $region31: #{tpu_custom_call.1} parent=0 // pred_check_branch
    %1037 = sbr.rel (0) target = $region33
  $region32: #{tpu_custom_call.1} parent=0 // pred_region
    _
  $region33: #{tpu_custom_call.1} parent=0 // pred_fallthru
    _
  // Predicated region
  $region34: #{tpu_custom_call.1} parent=0 // pred_check
    _
  $region35: #{tpu_custom_call.1} parent=0 // pred_check_branch
    %1039 = sbr.rel (0) target = $region37
  $region36: #{tpu_custom_call.1} parent=0 // pred_region
    _
  $region37: #{tpu_custom_call.1} parent=0 // pred_fallthru
    _

</llo_original>
